<compile_context>
chip_gen: v6e
topology: v6e:2x2x1
jax: 0.10.0
libtpu: 0.0.40
codegen_flags: <defaults>
</compile_context>

<pallas_src>
import functools

import jax
import jax.numpy as jnp
from jax import lax
from jax.experimental import pallas as pl
from jax.experimental.pallas import tpu as pltpu


# ------------------------------ Pallas kernel ------------------------------ #
def _fusion_v3_kernel(x_ref, res_ref, upk_ref,
                      wpre_ref, bpre_ref, wpre2_ref, bpre2_ref,
                      wpost_ref, bpost_ref, fw0_ref, fw1_ref,
                      o_ref, pad_ref, slab_ref,
                      *, OH, OW, Ce, Cd, Co):
    """One batch element per grid step; everything in (C, P) layout, P = OH*OW.

    x_ref    : (1, Cd, H*W)      low-res decoder feature (flattened spatial)
    res_ref  : (1, Ce, P)        encoder skip (flattened spatial)
    upk_ref  : (H*W, P)          bilinear x2 interpolation matrix (f32)
    w*_ref   : (Cout, 9*Cin)     bf16 conv weights, BN scale folded, tap-major columns
    b*_ref   : (Cout, 1)         f32 folded BN shift
    fw0/fw1  : (1, 1)            fusion weights (already relu+normalized)
    o_ref    : (1, Co, P)
    pad_ref  : (Cmax, L)         f32 flat H-padded staging buffer, L = P + 2*OW + 2
    slab_ref : (9*Cmax, P)       bf16 im2col slab
    """
    P = OH * OW
    OFF = OW + 1                       # flat position of image pixel (0, 0) in pad_ref

    # Column masks for the left/right taps (dw=0 / dw=2): in the flat layout those
    # taps would wrap to the neighbouring row at the image's first/last column.
    col = lax.broadcasted_iota(jnp.int32, (1, P), 1) % OW
    mask_l = (col != 0).astype(jnp.float32)
    mask_r = (col != OW - 1).astype(jnp.float32)

    # Zero pad/guard regions once per step; interiors are fully overwritten per conv.
    pad_ref[...] = jnp.zeros_like(pad_ref)

    def conv_bn_relu6(src_flat, cin, w_ref_, b_ref_):
        # Stage (cin, P) activations into the flat H-padded buffer.
        pad_ref[:cin, OFF:OFF + P] = src_flat
        # im2col: 9 contiguous shifted windows -> bf16 slab (9*cin, P).
        for dh in range(3):
            for dw in range(3):
                start = dh * OW + dw
                win = pad_ref[:cin, start:start + P]
                if dw == 0:
                    win = win * mask_l
                elif dw == 2:
                    win = win * mask_r
                tap = dh * 3 + dw
                slab_ref[tap * cin:(tap + 1) * cin, :] = win.astype(jnp.bfloat16)
        # Single K=9*cin MXU contraction, output (Cout, P) lane-dense, f32 accumulate.
        acc = jnp.dot(w_ref_[...], slab_ref[:9 * cin, :],
                      preferred_element_type=jnp.float32)
        return jnp.clip(acc + b_ref_[...], 0.0, 6.0)       # folded BN shift + ReLU6

    # Bilinear x2 upsample (align_corners=False) as one lane-dense f32 matmul.
    x_up = jnp.dot(x_ref[0], upk_ref[...],
                   preferred_element_type=jnp.float32)     # (Cd, P)

    a = conv_bn_relu6(res_ref[0], Ce, wpre_ref, bpre_ref)  # pre_conv(res)   -> (Cd, P)
    b = conv_bn_relu6(x_up, Cd, wpre2_ref, bpre2_ref)      # pre_conv2(x_up) -> (Cd, P)
    fused = fw0_ref[...] * (a * b) + fw1_ref[...] * x_up   # weighted fusion  (Cd, P)
    out = conv_bn_relu6(fused, Cd, wpost_ref, bpost_ref)   # post_conv       -> (Co, P)

    o_ref[0] = out.astype(o_ref.dtype)


def _fusion_v3_pallas(x, res, upkt, w_pre, b_pre, w_pre2, b_pre2,
                      w_post, b_post, fw0, fw1):
    N, Cd, H, W = x.shape
    _, Ce, OH, OW = res.shape
    P = OH * OW
    HW = H * W
    Co = w_post.shape[0]
    Cmax = max(Ce, Cd)
    L = P + 2 * OW + 2

    # Free bitcast-level reshapes (contiguous minor dims) to the flat layout.
    x_flat = x.reshape(N, Cd, HW)
    res_flat = res.reshape(N, Ce, P)

    kernel = functools.partial(_fusion_v3_kernel, OH=OH, OW=OW, Ce=Ce, Cd=Cd, Co=Co)
    out_flat = pl.pallas_call(
        kernel,
        out_shape=jax.ShapeDtypeStruct((N, Co, P), jnp.float32),
        grid_spec=pltpu.PrefetchScalarGridSpec(
            num_scalar_prefetch=0,
            grid=(N,),
            in_specs=[
                pl.BlockSpec((1, Cd, HW), lambda n: (n, 0, 0)),
                pl.BlockSpec((1, Ce, P), lambda n: (n, 0, 0)),
                pl.BlockSpec((HW, P), lambda n: (0, 0)),
                pl.BlockSpec((Cd, 9 * Ce), lambda n: (0, 0)),
                pl.BlockSpec((Cd, 1), lambda n: (0, 0)),
                pl.BlockSpec((Cd, 9 * Cd), lambda n: (0, 0)),
                pl.BlockSpec((Cd, 1), lambda n: (0, 0)),
                pl.BlockSpec((Co, 9 * Cd), lambda n: (0, 0)),
                pl.BlockSpec((Co, 1), lambda n: (0, 0)),
                pl.BlockSpec((1, 1), lambda n: (0, 0)),
                pl.BlockSpec((1, 1), lambda n: (0, 0)),
            ],
            out_specs=pl.BlockSpec((1, Co, P), lambda n: (n, 0, 0)),
            scratch_shapes=[
                pltpu.VMEM((Cmax, L), jnp.float32),          # flat padded staging buf
                pltpu.VMEM((9 * Cmax, P), jnp.bfloat16),     # im2col slab
            ],
        ),
        compiler_params=pltpu.CompilerParams(
            dimension_semantics=("parallel",)),
    )(x_flat, res_flat, upkt, w_pre, b_pre, w_pre2, b_pre2, w_post, b_post, fw0, fw1)
    return out_flat.reshape(N, Co, OH, OW)


# ------------------------------- JAX helpers -------------------------------- #
def _bilinear_up2x_matrix(H, W):
    """Constant (H*W, 4*H*W) matrix so that x_up_flat = x_flat @ M (align_corners=False)."""
    def axis_matrix(L):
        out = jnp.arange(2 * L, dtype=jnp.float32)
        src = jnp.clip((out + 0.5) / 2.0 - 0.5, 0.0, float(L - 1))
        i0 = jnp.floor(src)
        i1 = jnp.minimum(i0 + 1.0, float(L - 1))
        f = src - i0
        cols = jnp.arange(L, dtype=jnp.float32)
        return ((cols[None, :] == i0[:, None]) * (1.0 - f)[:, None]
                + (cols[None, :] == i1[:, None]) * f[:, None])       # (2L, L)
    Uh = axis_matrix(H)
    Uw = axis_matrix(W)
    # M[h*W + w, a*(2W) + b] = Uh[a, h] * Uw[b, w]
    return jnp.einsum("ah,bw->hwab", Uh, Uw).reshape(H * W, 4 * H * W)


def _upsample2x_bilinear_nchw_ref(x):
    """Gather-based reference for F.interpolate(scale=2, bilinear, align_corners=False)."""
    N, C, H, W = x.shape

    def coords(L):
        out = jnp.arange(2 * L, dtype=jnp.float32)
        src = jnp.clip((out + 0.5) / 2.0 - 0.5, 0.0, float(L - 1))
        i0 = jnp.floor(src).astype(jnp.int32)
        i1 = jnp.minimum(i0 + 1, L - 1)
        f = src - i0.astype(jnp.float32)
        return i0, i1, f

    h0, h1, fh = coords(H)
    w0, w1, fw = coords(W)
    rows = (x[:, :, h0, :] * (1.0 - fh)[None, None, :, None]
            + x[:, :, h1, :] * fh[None, None, :, None])
    return (rows[:, :, :, w0] * (1.0 - fw)[None, None, None, :]
            + rows[:, :, :, w1] * fw[None, None, None, :])


def _conv_bn_relu6_ref(x, p):
    y = lax.conv_general_dilated(
        x, p["w_oihw"], window_strides=(1, 1), padding=((1, 1), (1, 1)),
        dimension_numbers=("NCHW", "OIHW", "NCHW"),
        precision=lax.Precision.HIGHEST)
    y = y * p["scale"][None, :, None, None] + p["shift"][None, :, None, None]
    return jnp.clip(y, 0.0, 6.0)


# --------------------------------- Module ----------------------------------- #
class FusionModelV3Pallas:
    """JAX/Pallas port of FusionModelV3 (NCHW in/out, eval-mode BatchNorm)."""

    def __init__(self, encode_chan, decode_in_chan, decode_out_chan, eps=1e-08,
                 key=jax.random.PRNGKey(42)):
        self.eps = eps
        self.Ce, self.Cd, self.Co = encode_chan, decode_in_chan, decode_out_chan
        k1, k2, k3 = jax.random.split(key, 3)

        def make_conv_bn(k, cin, cout):
            # Conv2d weight (Cout, Cin, 3, 3), no bias; deterministic init.
            w = 0.1 * jax.random.normal(k, (cout, cin, 3, 3), jnp.float32)
            # BatchNorm2d eval-mode stats (deterministic, non-trivial).
            gamma = 1.0 + 0.05 * jnp.arange(cout, dtype=jnp.float32)
            beta = 0.02 * jnp.arange(cout, dtype=jnp.float32)
            mean = 0.01 * jnp.arange(cout, dtype=jnp.float32)
            var = 1.0 + 0.1 * jnp.arange(cout, dtype=jnp.float32)
            bn_eps = 1e-5                      # nn.BatchNorm2d default
            scale = gamma / jnp.sqrt(var + bn_eps)
            shift = beta - mean * scale
            # Fold BN scale into weights, reorder to (Cout, 9*Cin) with tap-major
            # columns (tap = dh*3+dw), cast to bf16 for the MXU.
            w_mat = jnp.transpose(w * scale[:, None, None, None],
                                  (0, 2, 3, 1)).reshape(cout, 9 * cin)
            return dict(w_oihw=w, scale=scale, shift=shift,
                        w_mat=w_mat.astype(jnp.bfloat16),
                        shift_col=shift.reshape(cout, 1))

        self.pre = make_conv_bn(k1, encode_chan, decode_in_chan)     # pre_conv
        self.pre2 = make_conv_bn(k2, decode_in_chan, decode_in_chan)  # pre_conv2
        self.post = make_conv_bn(k3, decode_in_chan, decode_out_chan)  # post_conv
        self.fuse_param = jnp.ones((2,), jnp.float32)  # nn.Parameter(torch.ones(2))

    def _fuse_weights(self):
        w = jax.nn.relu(self.fuse_param)
        return w / (jnp.sum(w) + self.eps)

    def __call__(self, x, res):
        # x: (N, Cd, H, W), res: (N, Ce, 2H, 2W), both NCHW.
        N, Cd, H, W = x.shape
        fw = self._fuse_weights()
        fw0 = fw[0].reshape(1, 1)
        fw1 = fw[1].reshape(1, 1)
        upkt = _bilinear_up2x_matrix(H, W)                 # (H*W, 4*H*W) f32
        return _fusion_v3_pallas(
            x, res, upkt,
            self.pre["w_mat"], self.pre["shift_col"],
            self.pre2["w_mat"], self.pre2["shift_col"],
            self.post["w_mat"], self.post["shift_col"],
            fw0, fw1)

    # Pure-JAX reference of the same forward (fp32), for correctness checking.
    def reference(self, x, res):
        x_up = _upsample2x_bilinear_nchw_ref(x)
        fw = self._fuse_weights()
        attn = _conv_bn_relu6_ref(res, self.pre) * _conv_bn_relu6_ref(x_up, self.pre2)
        fused = fw[0] * attn + fw[1] * x_up
        return _conv_bn_relu6_ref(fused, self.post)


# ---------------------------------- main ------------------------------------ #
if __name__ == "__main__":
    N = 2
    decode_in_chan = 4     # channels of x (low-res decoder feature)
    encode_chan = 4        # channels of res (high-res encoder skip)
    decode_out_chan = 8
    H = W = 8              # x spatial; res / output are 2H x 2W = 16 x 16

    key = jax.random.PRNGKey(0)
    kx, kr = jax.random.split(key)
    x = jax.random.normal(kx, (N, decode_in_chan, H, W), jnp.float32)
    res = jax.random.normal(kr, (N, encode_chan, 2 * H, 2 * W), jnp.float32)

    model = FusionModelV3Pallas(encode_chan, decode_in_chan, decode_out_chan)

    out = jax.block_until_ready(model(x, res))

    assert out.shape == (N, decode_out_chan, 2 * H, 2 * W), out.shape
    assert bool(jnp.all(jnp.isfinite(out)))
    assert bool(jnp.all(out >= 0.0)) and bool(jnp.all(out <= 6.0))   # ReLU6 range

    # Correctness vs. fp32 pure-JAX reference (kernel uses bf16 MXU operands).
    ref = jax.block_until_ready(model.reference(x, res))
    max_err = float(jnp.max(jnp.abs(out - ref)))
    assert max_err < 0.2, f"max |kernel - reference| = {max_err}"

    print("KERNEL_OK")
</pallas_src>

<mosaic_0001>
module attributes {stable_mosaic.version = 11 : i64} {
  func.func @_fusion_v3_kernel(%arg0: i32, %arg1: memref<1x4x64xf32, #tpu.memory_space<vmem>>, %arg2: memref<1x4x256xf32, #tpu.memory_space<vmem>>, %arg3: memref<64x256xf32, #tpu.memory_space<vmem>>, %arg4: memref<4x36xbf16, #tpu.memory_space<vmem>>, %arg5: memref<4x1xf32, #tpu.memory_space<vmem>>, %arg6: memref<4x36xbf16, #tpu.memory_space<vmem>>, %arg7: memref<4x1xf32, #tpu.memory_space<vmem>>, %arg8: memref<8x36xbf16, #tpu.memory_space<vmem>>, %arg9: memref<8x1xf32, #tpu.memory_space<vmem>>, %arg10: memref<1x1xf32, #tpu.memory_space<vmem>>, %arg11: memref<1x1xf32, #tpu.memory_space<vmem>>, %arg12: memref<1x8x256xf32, #tpu.memory_space<vmem>>, %arg13: memref<4x290xf32, #tpu.memory_space<vmem>>, %arg14: memref<36x256xbf16, #tpu.memory_space<vmem>>) attributes {dimension_semantics = [#tpu.dimension_semantics<parallel>], iteration_bounds = array<i64: 2>, scalar_prefetch = 0 : i64, scratch_operands = 2 : i64, tpu.core_type = #tpu.core_type<tc>, window_params = [{transform_indices = @transform_0, window_bounds = array<i64: 1, 4, 64>}, {transform_indices = @transform_1, window_bounds = array<i64: 1, 4, 256>}, {pipeline_mode = #tpu.pipeline_mode<synchronous>, transform_indices = @transform_2, window_bounds = array<i64: 64, 256>}, {pipeline_mode = #tpu.pipeline_mode<synchronous>, transform_indices = @transform_3, window_bounds = array<i64: 4, 36>}, {pipeline_mode = #tpu.pipeline_mode<synchronous>, transform_indices = @transform_4, window_bounds = array<i64: 4, 1>}, {pipeline_mode = #tpu.pipeline_mode<synchronous>, transform_indices = @transform_5, window_bounds = array<i64: 4, 36>}, {pipeline_mode = #tpu.pipeline_mode<synchronous>, transform_indices = @transform_6, window_bounds = array<i64: 4, 1>}, {pipeline_mode = #tpu.pipeline_mode<synchronous>, transform_indices = @transform_7, window_bounds = array<i64: 8, 36>}, {pipeline_mode = #tpu.pipeline_mode<synchronous>, transform_indices = @transform_8, window_bounds = array<i64: 8, 1>}, {pipeline_mode = #tpu.pipeline_mode<synchronous>, transform_indices = @transform_9, window_bounds = array<i64: 1, 1>}, {pipeline_mode = #tpu.pipeline_mode<synchronous>, transform_indices = @transform_10, window_bounds = array<i64: 1, 1>}, {transform_indices = @transform_11, window_bounds = array<i64: 1, 8, 256>}]} {
    %0 = tpu.iota {dimensions = array<i32: 1>} : vector<1x256xi32>
    %c16_i32 = arith.constant 16 : i32
    %c0_i32 = arith.constant 0 : i32
    %1 = arith.cmpi eq, %c16_i32, %c0_i32 : i32
    %c1_i32 = arith.constant 1 : i32
    %2 = arith.select %1, %c1_i32, %c16_i32 : i32
    %3 = vector.broadcast %2 : i32 to vector<1x256xi32>
    %4 = arith.remsi %0, %3 : vector<1x256xi32>
    %c0_i32_0 = arith.constant 0 : i32
    %5 = vector.broadcast %c0_i32_0 : i32 to vector<1x256xi32>
    %6 = arith.cmpi ne, %4, %5 : vector<1x256xi32>
    %c0_i32_1 = arith.constant 0 : i32
    %7 = vector.broadcast %c0_i32_1 : i32 to vector<1x256xi32>
    %8 = arith.cmpi slt, %4, %7 : vector<1x256xi32>
    %c0_i32_2 = arith.constant 0 : i32
    %9 = arith.cmpi slt, %2, %c0_i32_2 : i32
    %10 = vector.broadcast %9 : i1 to vector<1x256xi1>
    %11 = vector.broadcast %10 : vector<1x256xi1> to vector<1x256xi1>
    %12 = arith.xori %8, %11 : vector<1x256xi1>
    %13 = arith.andi %12, %6 : vector<1x256xi1>
    %14 = vector.broadcast %2 : i32 to vector<1x256xi32>
    %15 = arith.addi %4, %14 : vector<1x256xi32>
    %16 = arith.select %13, %15, %4 : vector<1x256xi1>, vector<1x256xi32>
    %c0_i32_3 = arith.constant 0 : i32
    %17 = vector.broadcast %c0_i32_3 : i32 to vector<1x256xi32>
    %18 = arith.cmpi ne, %16, %17 : vector<1x256xi32>
    %19 = arith.extui %18 : vector<1x256xi1> to vector<1x256xi32>
    %20 = arith.sitofp %19 : vector<1x256xi32> to vector<1x256xf32>
    %c15_i32 = arith.constant 15 : i32
    %21 = vector.broadcast %c15_i32 : i32 to vector<1x256xi32>
    %22 = arith.cmpi ne, %16, %21 : vector<1x256xi32>
    %23 = arith.extui %22 : vector<1x256xi1> to vector<1x256xi32>
    %24 = arith.sitofp %23 : vector<1x256xi32> to vector<1x256xf32>
    %cst = arith.constant 0.000000e+00 : f32
    %25 = vector.broadcast %cst : f32 to vector<4x290xf32>
    %c0 = arith.constant 0 : index
    %c0_4 = arith.constant 0 : index
    %26 = vector.load %arg13[%c0, %c0_4] : memref<4x290xf32, #tpu.memory_space<vmem>>, vector<4x290xf32>
    tpu.vector_store %arg13[%c0, %c0_4], %25 {strides = array<i32>} : memref<4x290xf32, #tpu.memory_space<vmem>>, vector<4x290xf32>,
    %c0_5 = arith.constant 0 : index
    %c0_6 = arith.constant 0 : index
    %c0_7 = arith.constant 0 : index
    %27 = vector.load %arg1[%c0_5, %c0_6, %c0_7] : memref<1x4x64xf32, #tpu.memory_space<vmem>>, vector<1x4x64xf32>
    %28 = vector.shape_cast %27 : vector<1x4x64xf32> to vector<4x64xf32>
    %c0_8 = arith.constant 0 : index
    %c0_9 = arith.constant 0 : index
    %29 = vector.load %arg3[%c0_8, %c0_9] : memref<64x256xf32, #tpu.memory_space<vmem>>, vector<64x256xf32>
    %cst_10 = arith.constant dense<0.000000e+00> : vector<4x256xf32>
    %30 = tpu.matmul %28, %29, %cst_10 {dimension_numbers = #tpu.dot_dimension_numbers<[1], [0], [0], [1], [0, 0, 1, 1], [], []>} : vector<4x64xf32>, vector<64x256xf32>, vector<4x256xf32> -> vector<4x256xf32>
    %c0_11 = arith.constant 0 : index
    %c0_12 = arith.constant 0 : index
    %c0_13 = arith.constant 0 : index
    %31 = vector.load %arg2[%c0_11, %c0_12, %c0_13] : memref<1x4x256xf32, #tpu.memory_space<vmem>>, vector<1x4x256xf32>
    %32 = vector.shape_cast %31 : vector<1x4x256xf32> to vector<4x256xf32>
    %c0_14 = arith.constant 0 : index
    %c17 = arith.constant 17 : index
    %33 = vector.load %arg13[%c0_14, %c17] : memref<4x290xf32, #tpu.memory_space<vmem>>, vector<4x256xf32>
    tpu.vector_store %arg13[%c0_14, %c17], %32 {strides = array<i32>} : memref<4x290xf32, #tpu.memory_space<vmem>>, vector<4x256xf32>,
    %c0_15 = arith.constant 0 : index
    %c0_16 = arith.constant 0 : index
    %34 = vector.load %arg13[%c0_15, %c0_16] : memref<4x290xf32, #tpu.memory_space<vmem>>, vector<4x256xf32>
    %35 = vector.broadcast %20 : vector<1x256xf32> to vector<4x256xf32>
    %36 = arith.mulf %34, %35 : vector<4x256xf32>
    %37 = arith.truncf %36 : vector<4x256xf32> to vector<4x256xbf16>
    %c0_17 = arith.constant 0 : index
    %c0_18 = arith.constant 0 : index
    %38 = vector.load %arg14[%c0_17, %c0_18] : memref<36x256xbf16, #tpu.memory_space<vmem>>, vector<4x256xbf16>
    tpu.vector_store %arg14[%c0_17, %c0_18], %37 {strides = array<i32>} : memref<36x256xbf16, #tpu.memory_space<vmem>>, vector<4x256xbf16>,
    %c0_19 = arith.constant 0 : index
    %c1 = arith.constant 1 : index
    %39 = vector.load %arg13[%c0_19, %c1] : memref<4x290xf32, #tpu.memory_space<vmem>>, vector<4x256xf32>
    %40 = arith.truncf %39 : vector<4x256xf32> to vector<4x256xbf16>
    %c4 = arith.constant 4 : index
    %c0_20 = arith.constant 0 : index
    %41 = vector.load %arg14[%c4, %c0_20] : memref<36x256xbf16, #tpu.memory_space<vmem>>, vector<4x256xbf16>
    tpu.vector_store %arg14[%c4, %c0_20], %40 {strides = array<i32>} : memref<36x256xbf16, #tpu.memory_space<vmem>>, vector<4x256xbf16>,
    %c0_21 = arith.constant 0 : index
    %c2 = arith.constant 2 : index
    %42 = vector.load %arg13[%c0_21, %c2] : memref<4x290xf32, #tpu.memory_space<vmem>>, vector<4x256xf32>
    %43 = vector.broadcast %24 : vector<1x256xf32> to vector<4x256xf32>
    %44 = arith.mulf %42, %43 : vector<4x256xf32>
    %45 = arith.truncf %44 : vector<4x256xf32> to vector<4x256xbf16>
    %c8 = arith.constant 8 : index
    %c0_22 = arith.constant 0 : index
    %46 = vector.load %arg14[%c8, %c0_22] : memref<36x256xbf16, #tpu.memory_space<vmem>>, vector<4x256xbf16>
    tpu.vector_store %arg14[%c8, %c0_22], %45 {strides = array<i32>} : memref<36x256xbf16, #tpu.memory_space<vmem>>, vector<4x256xbf16>,
    %c0_23 = arith.constant 0 : index
    %c16 = arith.constant 16 : index
    %47 = vector.load %arg13[%c0_23, %c16] : memref<4x290xf32, #tpu.memory_space<vmem>>, vector<4x256xf32>
    %48 = vector.broadcast %20 : vector<1x256xf32> to vector<4x256xf32>
    %49 = arith.mulf %47, %48 : vector<4x256xf32>
    %50 = arith.truncf %49 : vector<4x256xf32> to vector<4x256xbf16>
    %c12 = arith.constant 12 : index
    %c0_24 = arith.constant 0 : index
    %51 = vector.load %arg14[%c12, %c0_24] : memref<36x256xbf16, #tpu.memory_space<vmem>>, vector<4x256xbf16>
    tpu.vector_store %arg14[%c12, %c0_24], %50 {strides = array<i32>} : memref<36x256xbf16, #tpu.memory_space<vmem>>, vector<4x256xbf16>,
    %c0_25 = arith.constant 0 : index
    %c17_26 = arith.constant 17 : index
    %52 = vector.load %arg13[%c0_25, %c17_26] : memref<4x290xf32, #tpu.memory_space<vmem>>, vector<4x256xf32>
    %53 = arith.truncf %52 : vector<4x256xf32> to vector<4x256xbf16>
    %c16_27 = arith.constant 16 : index
    %c0_28 = arith.constant 0 : index
    %54 = vector.load %arg14[%c16_27, %c0_28] : memref<36x256xbf16, #tpu.memory_space<vmem>>, vector<4x256xbf16>
    tpu.vector_store %arg14[%c16_27, %c0_28], %53 {strides = array<i32>} : memref<36x256xbf16, #tpu.memory_space<vmem>>, vector<4x256xbf16>,
    %c0_29 = arith.constant 0 : index
    %c18 = arith.constant 18 : index
    %55 = vector.load %arg13[%c0_29, %c18] : memref<4x290xf32, #tpu.memory_space<vmem>>, vector<4x256xf32>
    %56 = vector.broadcast %24 : vector<1x256xf32> to vector<4x256xf32>
    %57 = arith.mulf %55, %56 : vector<4x256xf32>
    %58 = arith.truncf %57 : vector<4x256xf32> to vector<4x256xbf16>
    %c20 = arith.constant 20 : index
    %c0_30 = arith.constant 0 : index
    %59 = vector.load %arg14[%c20, %c0_30] : memref<36x256xbf16, #tpu.memory_space<vmem>>, vector<4x256xbf16>
    tpu.vector_store %arg14[%c20, %c0_30], %58 {strides = array<i32>} : memref<36x256xbf16, #tpu.memory_space<vmem>>, vector<4x256xbf16>,
    %c0_31 = arith.constant 0 : index
    %c32 = arith.constant 32 : index
    %60 = vector.load %arg13[%c0_31, %c32] : memref<4x290xf32, #tpu.memory_space<vmem>>, vector<4x256xf32>
    %61 = vector.broadcast %20 : vector<1x256xf32> to vector<4x256xf32>
    %62 = arith.mulf %60, %61 : vector<4x256xf32>
    %63 = arith.truncf %62 : vector<4x256xf32> to vector<4x256xbf16>
    %c24 = arith.constant 24 : index
    %c0_32 = arith.constant 0 : index
    %64 = vector.load %arg14[%c24, %c0_32] : memref<36x256xbf16, #tpu.memory_space<vmem>>, vector<4x256xbf16>
    tpu.vector_store %arg14[%c24, %c0_32], %63 {strides = array<i32>} : memref<36x256xbf16, #tpu.memory_space<vmem>>, vector<4x256xbf16>,
    %c0_33 = arith.constant 0 : index
    %c33 = arith.constant 33 : index
    %65 = vector.load %arg13[%c0_33, %c33] : memref<4x290xf32, #tpu.memory_space<vmem>>, vector<4x256xf32>
    %66 = arith.truncf %65 : vector<4x256xf32> to vector<4x256xbf16>
    %c28 = arith.constant 28 : index
    %c0_34 = arith.constant 0 : index
    %67 = vector.load %arg14[%c28, %c0_34] : memref<36x256xbf16, #tpu.memory_space<vmem>>, vector<4x256xbf16>
    tpu.vector_store %arg14[%c28, %c0_34], %66 {strides = array<i32>} : memref<36x256xbf16, #tpu.memory_space<vmem>>, vector<4x256xbf16>,
    %c0_35 = arith.constant 0 : index
    %c34 = arith.constant 34 : index
    %68 = vector.load %arg13[%c0_35, %c34] : memref<4x290xf32, #tpu.memory_space<vmem>>, vector<4x256xf32>
    %69 = vector.broadcast %24 : vector<1x256xf32> to vector<4x256xf32>
    %70 = arith.mulf %68, %69 : vector<4x256xf32>
    %71 = arith.truncf %70 : vector<4x256xf32> to vector<4x256xbf16>
    %c32_36 = arith.constant 32 : index
    %c0_37 = arith.constant 0 : index
    %72 = vector.load %arg14[%c32_36, %c0_37] : memref<36x256xbf16, #tpu.memory_space<vmem>>, vector<4x256xbf16>
    tpu.vector_store %arg14[%c32_36, %c0_37], %71 {strides = array<i32>} : memref<36x256xbf16, #tpu.memory_space<vmem>>, vector<4x256xbf16>,
    %c0_38 = arith.constant 0 : index
    %c0_39 = arith.constant 0 : index
    %73 = vector.load %arg4[%c0_38, %c0_39] : memref<4x36xbf16, #tpu.memory_space<vmem>>, vector<4x36xbf16>
    %c0_40 = arith.constant 0 : index
    %c0_41 = arith.constant 0 : index
    %74 = vector.load %arg14[%c0_40, %c0_41] : memref<36x256xbf16, #tpu.memory_space<vmem>>, vector<36x256xbf16>
    %cst_42 = arith.constant dense<0.000000e+00> : vector<4x256xf32>
    %75 = tpu.matmul %73, %74, %cst_42 {dimension_numbers = #tpu.dot_dimension_numbers<[1], [0], [0], [1], [0, 0, 1, 1], [], []>} : vector<4x36xbf16>, vector<36x256xbf16>, vector<4x256xf32> -> vector<4x256xf32>
    %c0_43 = arith.constant 0 : index
    %c0_44 = arith.constant 0 : index
    %76 = vector.load %arg5[%c0_43, %c0_44] : memref<4x1xf32, #tpu.memory_space<vmem>>, vector<4x1xf32>
    %77 = vector.broadcast %76 : vector<4x1xf32> to vector<4x256xf32>
    %78 = arith.addf %75, %77 : vector<4x256xf32>
    %cst_45 = arith.constant 0.000000e+00 : f32
    %cst_46 = arith.constant 6.000000e+00 : f32
    %79 = vector.broadcast %cst_45 : f32 to vector<4x256xf32>
    %80 = arith.maximumf %79, %78 : vector<4x256xf32>
    %81 = vector.broadcast %cst_46 : f32 to vector<4x256xf32>
    %82 = arith.minimumf %81, %80 : vector<4x256xf32>
    %c0_47 = arith.constant 0 : index
    %c17_48 = arith.constant 17 : index
    %83 = vector.load %arg13[%c0_47, %c17_48] : memref<4x290xf32, #tpu.memory_space<vmem>>, vector<4x256xf32>
    tpu.vector_store %arg13[%c0_47, %c17_48], %30 {strides = array<i32>} : memref<4x290xf32, #tpu.memory_space<vmem>>, vector<4x256xf32>,
    %c0_49 = arith.constant 0 : index
    %c0_50 = arith.constant 0 : index
    %84 = vector.load %arg13[%c0_49, %c0_50] : memref<4x290xf32, #tpu.memory_space<vmem>>, vector<4x256xf32>
    %85 = vector.broadcast %20 : vector<1x256xf32> to vector<4x256xf32>
    %86 = arith.mulf %84, %85 : vector<4x256xf32>
    %87 = arith.truncf %86 : vector<4x256xf32> to vector<4x256xbf16>
    %c0_51 = arith.constant 0 : index
    %c0_52 = arith.constant 0 : index
    %88 = vector.load %arg14[%c0_51, %c0_52] : memref<36x256xbf16, #tpu.memory_space<vmem>>, vector<4x256xbf16>
    tpu.vector_store %arg14[%c0_51, %c0_52], %87 {strides = array<i32>} : memref<36x256xbf16, #tpu.memory_space<vmem>>, vector<4x256xbf16>,
    %c0_53 = arith.constant 0 : index
    %c1_54 = arith.constant 1 : index
    %89 = vector.load %arg13[%c0_53, %c1_54] : memref<4x290xf32, #tpu.memory_space<vmem>>, vector<4x256xf32>
    %90 = arith.truncf %89 : vector<4x256xf32> to vector<4x256xbf16>
    %c4_55 = arith.constant 4 : index
    %c0_56 = arith.constant 0 : index
    %91 = vector.load %arg14[%c4_55, %c0_56] : memref<36x256xbf16, #tpu.memory_space<vmem>>, vector<4x256xbf16>
    tpu.vector_store %arg14[%c4_55, %c0_56], %90 {strides = array<i32>} : memref<36x256xbf16, #tpu.memory_space<vmem>>, vector<4x256xbf16>,
    %c0_57 = arith.constant 0 : index
    %c2_58 = arith.constant 2 : index
    %92 = vector.load %arg13[%c0_57, %c2_58] : memref<4x290xf32, #tpu.memory_space<vmem>>, vector<4x256xf32>
    %93 = vector.broadcast %24 : vector<1x256xf32> to vector<4x256xf32>
    %94 = arith.mulf %92, %93 : vector<4x256xf32>
    %95 = arith.truncf %94 : vector<4x256xf32> to vector<4x256xbf16>
    %c8_59 = arith.constant 8 : index
    %c0_60 = arith.constant 0 : index
    %96 = vector.load %arg14[%c8_59, %c0_60] : memref<36x256xbf16, #tpu.memory_space<vmem>>, vector<4x256xbf16>
    tpu.vector_store %arg14[%c8_59, %c0_60], %95 {strides = array<i32>} : memref<36x256xbf16, #tpu.memory_space<vmem>>, vector<4x256xbf16>,
    %c0_61 = arith.constant 0 : index
    %c16_62 = arith.constant 16 : index
    %97 = vector.load %arg13[%c0_61, %c16_62] : memref<4x290xf32, #tpu.memory_space<vmem>>, vector<4x256xf32>
    %98 = vector.broadcast %20 : vector<1x256xf32> to vector<4x256xf32>
    %99 = arith.mulf %97, %98 : vector<4x256xf32>
    %100 = arith.truncf %99 : vector<4x256xf32> to vector<4x256xbf16>
    %c12_63 = arith.constant 12 : index
    %c0_64 = arith.constant 0 : index
    %101 = vector.load %arg14[%c12_63, %c0_64] : memref<36x256xbf16, #tpu.memory_space<vmem>>, vector<4x256xbf16>
    tpu.vector_store %arg14[%c12_63, %c0_64], %100 {strides = array<i32>} : memref<36x256xbf16, #tpu.memory_space<vmem>>, vector<4x256xbf16>,
    %c0_65 = arith.constant 0 : index
    %c17_66 = arith.constant 17 : index
    %102 = vector.load %arg13[%c0_65, %c17_66] : memref<4x290xf32, #tpu.memory_space<vmem>>, vector<4x256xf32>
    %103 = arith.truncf %102 : vector<4x256xf32> to vector<4x256xbf16>
    %c16_67 = arith.constant 16 : index
    %c0_68 = arith.constant 0 : index
    %104 = vector.load %arg14[%c16_67, %c0_68] : memref<36x256xbf16, #tpu.memory_space<vmem>>, vector<4x256xbf16>
    tpu.vector_store %arg14[%c16_67, %c0_68], %103 {strides = array<i32>} : memref<36x256xbf16, #tpu.memory_space<vmem>>, vector<4x256xbf16>,
    %c0_69 = arith.constant 0 : index
    %c18_70 = arith.constant 18 : index
    %105 = vector.load %arg13[%c0_69, %c18_70] : memref<4x290xf32, #tpu.memory_space<vmem>>, vector<4x256xf32>
    %106 = vector.broadcast %24 : vector<1x256xf32> to vector<4x256xf32>
    %107 = arith.mulf %105, %106 : vector<4x256xf32>
    %108 = arith.truncf %107 : vector<4x256xf32> to vector<4x256xbf16>
    %c20_71 = arith.constant 20 : index
    %c0_72 = arith.constant 0 : index
    %109 = vector.load %arg14[%c20_71, %c0_72] : memref<36x256xbf16, #tpu.memory_space<vmem>>, vector<4x256xbf16>
    tpu.vector_store %arg14[%c20_71, %c0_72], %108 {strides = array<i32>} : memref<36x256xbf16, #tpu.memory_space<vmem>>, vector<4x256xbf16>,
    %c0_73 = arith.constant 0 : index
    %c32_74 = arith.constant 32 : index
    %110 = vector.load %arg13[%c0_73, %c32_74] : memref<4x290xf32, #tpu.memory_space<vmem>>, vector<4x256xf32>
    %111 = vector.broadcast %20 : vector<1x256xf32> to vector<4x256xf32>
    %112 = arith.mulf %110, %111 : vector<4x256xf32>
    %113 = arith.truncf %112 : vector<4x256xf32> to vector<4x256xbf16>
    %c24_75 = arith.constant 24 : index
    %c0_76 = arith.constant 0 : index
    %114 = vector.load %arg14[%c24_75, %c0_76] : memref<36x256xbf16, #tpu.memory_space<vmem>>, vector<4x256xbf16>
    tpu.vector_store %arg14[%c24_75, %c0_76], %113 {strides = array<i32>} : memref<36x256xbf16, #tpu.memory_space<vmem>>, vector<4x256xbf16>,
    %c0_77 = arith.constant 0 : index
    %c33_78 = arith.constant 33 : index
    %115 = vector.load %arg13[%c0_77, %c33_78] : memref<4x290xf32, #tpu.memory_space<vmem>>, vector<4x256xf32>
    %116 = arith.truncf %115 : vector<4x256xf32> to vector<4x256xbf16>
    %c28_79 = arith.constant 28 : index
    %c0_80 = arith.constant 0 : index
    %117 = vector.load %arg14[%c28_79, %c0_80] : memref<36x256xbf16, #tpu.memory_space<vmem>>, vector<4x256xbf16>
    tpu.vector_store %arg14[%c28_79, %c0_80], %116 {strides = array<i32>} : memref<36x256xbf16, #tpu.memory_space<vmem>>, vector<4x256xbf16>,
    %c0_81 = arith.constant 0 : index
    %c34_82 = arith.constant 34 : index
    %118 = vector.load %arg13[%c0_81, %c34_82] : memref<4x290xf32, #tpu.memory_space<vmem>>, vector<4x256xf32>
    %119 = vector.broadcast %24 : vector<1x256xf32> to vector<4x256xf32>
    %120 = arith.mulf %118, %119 : vector<4x256xf32>
    %121 = arith.truncf %120 : vector<4x256xf32> to vector<4x256xbf16>
    %c32_83 = arith.constant 32 : index
    %c0_84 = arith.constant 0 : index
    %122 = vector.load %arg14[%c32_83, %c0_84] : memref<36x256xbf16, #tpu.memory_space<vmem>>, vector<4x256xbf16>
    tpu.vector_store %arg14[%c32_83, %c0_84], %121 {strides = array<i32>} : memref<36x256xbf16, #tpu.memory_space<vmem>>, vector<4x256xbf16>,
    %c0_85 = arith.constant 0 : index
    %c0_86 = arith.constant 0 : index
    %123 = vector.load %arg6[%c0_85, %c0_86] : memref<4x36xbf16, #tpu.memory_space<vmem>>, vector<4x36xbf16>
    %c0_87 = arith.constant 0 : index
    %c0_88 = arith.constant 0 : index
    %124 = vector.load %arg14[%c0_87, %c0_88] : memref<36x256xbf16, #tpu.memory_space<vmem>>, vector<36x256xbf16>
    %cst_89 = arith.constant dense<0.000000e+00> : vector<4x256xf32>
    %125 = tpu.matmul %123, %124, %cst_89 {dimension_numbers = #tpu.dot_dimension_numbers<[1], [0], [0], [1], [0, 0, 1, 1], [], []>} : vector<4x36xbf16>, vector<36x256xbf16>, vector<4x256xf32> -> vector<4x256xf32>
    %c0_90 = arith.constant 0 : index
    %c0_91 = arith.constant 0 : index
    %126 = vector.load %arg7[%c0_90, %c0_91] : memref<4x1xf32, #tpu.memory_space<vmem>>, vector<4x1xf32>
    %127 = vector.broadcast %126 : vector<4x1xf32> to vector<4x256xf32>
    %128 = arith.addf %125, %127 : vector<4x256xf32>
    %cst_92 = arith.constant 0.000000e+00 : f32
    %cst_93 = arith.constant 6.000000e+00 : f32
    %129 = vector.broadcast %cst_92 : f32 to vector<4x256xf32>
    %130 = arith.maximumf %129, %128 : vector<4x256xf32>
    %131 = vector.broadcast %cst_93 : f32 to vector<4x256xf32>
    %132 = arith.minimumf %131, %130 : vector<4x256xf32>
    %c0_94 = arith.constant 0 : index
    %c0_95 = arith.constant 0 : index
    %133 = vector.load %arg10[%c0_94, %c0_95] : memref<1x1xf32, #tpu.memory_space<vmem>>, vector<1x1xf32>
    %134 = arith.mulf %82, %132 : vector<4x256xf32>
    %135 = vector.broadcast %133 : vector<1x1xf32> to vector<4x256xf32>
    %136 = arith.mulf %135, %134 : vector<4x256xf32>
    %c0_96 = arith.constant 0 : index
    %c0_97 = arith.constant 0 : index
    %137 = vector.load %arg11[%c0_96, %c0_97] : memref<1x1xf32, #tpu.memory_space<vmem>>, vector<1x1xf32>
    %138 = vector.broadcast %137 : vector<1x1xf32> to vector<4x256xf32>
    %139 = arith.mulf %138, %30 : vector<4x256xf32>
    %140 = arith.addf %136, %139 : vector<4x256xf32>
    %c0_98 = arith.constant 0 : index
    %c17_99 = arith.constant 17 : index
    %141 = vector.load %arg13[%c0_98, %c17_99] : memref<4x290xf32, #tpu.memory_space<vmem>>, vector<4x256xf32>
    tpu.vector_store %arg13[%c0_98, %c17_99], %140 {strides = array<i32>} : memref<4x290xf32, #tpu.memory_space<vmem>>, vector<4x256xf32>,
    %c0_100 = arith.constant 0 : index
    %c0_101 = arith.constant 0 : index
    %142 = vector.load %arg13[%c0_100, %c0_101] : memref<4x290xf32, #tpu.memory_space<vmem>>, vector<4x256xf32>
    %143 = vector.broadcast %20 : vector<1x256xf32> to vector<4x256xf32>
    %144 = arith.mulf %142, %143 : vector<4x256xf32>
    %145 = arith.truncf %144 : vector<4x256xf32> to vector<4x256xbf16>
    %c0_102 = arith.constant 0 : index
    %c0_103 = arith.constant 0 : index
    %146 = vector.load %arg14[%c0_102, %c0_103] : memref<36x256xbf16, #tpu.memory_space<vmem>>, vector<4x256xbf16>
    tpu.vector_store %arg14[%c0_102, %c0_103], %145 {strides = array<i32>} : memref<36x256xbf16, #tpu.memory_space<vmem>>, vector<4x256xbf16>,
    %c0_104 = arith.constant 0 : index
    %c1_105 = arith.constant 1 : index
    %147 = vector.load %arg13[%c0_104, %c1_105] : memref<4x290xf32, #tpu.memory_space<vmem>>, vector<4x256xf32>
    %148 = arith.truncf %147 : vector<4x256xf32> to vector<4x256xbf16>
    %c4_106 = arith.constant 4 : index
    %c0_107 = arith.constant 0 : index
    %149 = vector.load %arg14[%c4_106, %c0_107] : memref<36x256xbf16, #tpu.memory_space<vmem>>, vector<4x256xbf16>
    tpu.vector_store %arg14[%c4_106, %c0_107], %148 {strides = array<i32>} : memref<36x256xbf16, #tpu.memory_space<vmem>>, vector<4x256xbf16>,
    %c0_108 = arith.constant 0 : index
    %c2_109 = arith.constant 2 : index
    %150 = vector.load %arg13[%c0_108, %c2_109] : memref<4x290xf32, #tpu.memory_space<vmem>>, vector<4x256xf32>
    %151 = vector.broadcast %24 : vector<1x256xf32> to vector<4x256xf32>
    %152 = arith.mulf %150, %151 : vector<4x256xf32>
    %153 = arith.truncf %152 : vector<4x256xf32> to vector<4x256xbf16>
    %c8_110 = arith.constant 8 : index
    %c0_111 = arith.constant 0 : index
    %154 = vector.load %arg14[%c8_110, %c0_111] : memref<36x256xbf16, #tpu.memory_space<vmem>>, vector<4x256xbf16>
    tpu.vector_store %arg14[%c8_110, %c0_111], %153 {strides = array<i32>} : memref<36x256xbf16, #tpu.memory_space<vmem>>, vector<4x256xbf16>,
    %c0_112 = arith.constant 0 : index
    %c16_113 = arith.constant 16 : index
    %155 = vector.load %arg13[%c0_112, %c16_113] : memref<4x290xf32, #tpu.memory_space<vmem>>, vector<4x256xf32>
    %156 = vector.broadcast %20 : vector<1x256xf32> to vector<4x256xf32>
    %157 = arith.mulf %155, %156 : vector<4x256xf32>
    %158 = arith.truncf %157 : vector<4x256xf32> to vector<4x256xbf16>
    %c12_114 = arith.constant 12 : index
    %c0_115 = arith.constant 0 : index
    %159 = vector.load %arg14[%c12_114, %c0_115] : memref<36x256xbf16, #tpu.memory_space<vmem>>, vector<4x256xbf16>
    tpu.vector_store %arg14[%c12_114, %c0_115], %158 {strides = array<i32>} : memref<36x256xbf16, #tpu.memory_space<vmem>>, vector<4x256xbf16>,
    %c0_116 = arith.constant 0 : index
    %c17_117 = arith.constant 17 : index
    %160 = vector.load %arg13[%c0_116, %c17_117] : memref<4x290xf32, #tpu.memory_space<vmem>>, vector<4x256xf32>
    %161 = arith.truncf %160 : vector<4x256xf32> to vector<4x256xbf16>
    %c16_118 = arith.constant 16 : index
    %c0_119 = arith.constant 0 : index
    %162 = vector.load %arg14[%c16_118, %c0_119] : memref<36x256xbf16, #tpu.memory_space<vmem>>, vector<4x256xbf16>
    tpu.vector_store %arg14[%c16_118, %c0_119], %161 {strides = array<i32>} : memref<36x256xbf16, #tpu.memory_space<vmem>>, vector<4x256xbf16>,
    %c0_120 = arith.constant 0 : index
    %c18_121 = arith.constant 18 : index
    %163 = vector.load %arg13[%c0_120, %c18_121] : memref<4x290xf32, #tpu.memory_space<vmem>>, vector<4x256xf32>
    %164 = vector.broadcast %24 : vector<1x256xf32> to vector<4x256xf32>
    %165 = arith.mulf %163, %164 : vector<4x256xf32>
    %166 = arith.truncf %165 : vector<4x256xf32> to vector<4x256xbf16>
    %c20_122 = arith.constant 20 : index
    %c0_123 = arith.constant 0 : index
    %167 = vector.load %arg14[%c20_122, %c0_123] : memref<36x256xbf16, #tpu.memory_space<vmem>>, vector<4x256xbf16>
    tpu.vector_store %arg14[%c20_122, %c0_123], %166 {strides = array<i32>} : memref<36x256xbf16, #tpu.memory_space<vmem>>, vector<4x256xbf16>,
    %c0_124 = arith.constant 0 : index
    %c32_125 = arith.constant 32 : index
    %168 = vector.load %arg13[%c0_124, %c32_125] : memref<4x290xf32, #tpu.memory_space<vmem>>, vector<4x256xf32>
    %169 = vector.broadcast %20 : vector<1x256xf32> to vector<4x256xf32>
    %170 = arith.mulf %168, %169 : vector<4x256xf32>
    %171 = arith.truncf %170 : vector<4x256xf32> to vector<4x256xbf16>
    %c24_126 = arith.constant 24 : index
    %c0_127 = arith.constant 0 : index
    %172 = vector.load %arg14[%c24_126, %c0_127] : memref<36x256xbf16, #tpu.memory_space<vmem>>, vector<4x256xbf16>
    tpu.vector_store %arg14[%c24_126, %c0_127], %171 {strides = array<i32>} : memref<36x256xbf16, #tpu.memory_space<vmem>>, vector<4x256xbf16>,
    %c0_128 = arith.constant 0 : index
    %c33_129 = arith.constant 33 : index
    %173 = vector.load %arg13[%c0_128, %c33_129] : memref<4x290xf32, #tpu.memory_space<vmem>>, vector<4x256xf32>
    %174 = arith.truncf %173 : vector<4x256xf32> to vector<4x256xbf16>
    %c28_130 = arith.constant 28 : index
    %c0_131 = arith.constant 0 : index
    %175 = vector.load %arg14[%c28_130, %c0_131] : memref<36x256xbf16, #tpu.memory_space<vmem>>, vector<4x256xbf16>
    tpu.vector_store %arg14[%c28_130, %c0_131], %174 {strides = array<i32>} : memref<36x256xbf16, #tpu.memory_space<vmem>>, vector<4x256xbf16>,
    %c0_132 = arith.constant 0 : index
    %c34_133 = arith.constant 34 : index
    %176 = vector.load %arg13[%c0_132, %c34_133] : memref<4x290xf32, #tpu.memory_space<vmem>>, vector<4x256xf32>
    %177 = vector.broadcast %24 : vector<1x256xf32> to vector<4x256xf32>
    %178 = arith.mulf %176, %177 : vector<4x256xf32>
    %179 = arith.truncf %178 : vector<4x256xf32> to vector<4x256xbf16>
    %c32_134 = arith.constant 32 : index
    %c0_135 = arith.constant 0 : index
    %180 = vector.load %arg14[%c32_134, %c0_135] : memref<36x256xbf16, #tpu.memory_space<vmem>>, vector<4x256xbf16>
    tpu.vector_store %arg14[%c32_134, %c0_135], %179 {strides = array<i32>} : memref<36x256xbf16, #tpu.memory_space<vmem>>, vector<4x256xbf16>,
    %c0_136 = arith.constant 0 : index
    %c0_137 = arith.constant 0 : index
    %181 = vector.load %arg8[%c0_136, %c0_137] : memref<8x36xbf16, #tpu.memory_space<vmem>>, vector<8x36xbf16>
    %c0_138 = arith.constant 0 : index
    %c0_139 = arith.constant 0 : index
    %182 = vector.load %arg14[%c0_138, %c0_139] : memref<36x256xbf16, #tpu.memory_space<vmem>>, vector<36x256xbf16>
    %cst_140 = arith.constant dense<0.000000e+00> : vector<8x256xf32>
    %183 = tpu.matmul %181, %182, %cst_140 {dimension_numbers = #tpu.dot_dimension_numbers<[1], [0], [0], [1], [0, 0, 1, 1], [], []>} : vector<8x36xbf16>, vector<36x256xbf16>, vector<8x256xf32> -> vector<8x256xf32>
    %c0_141 = arith.constant 0 : index
    %c0_142 = arith.constant 0 : index
    %184 = vector.load %arg9[%c0_141, %c0_142] : memref<8x1xf32, #tpu.memory_space<vmem>>, vector<8x1xf32>
    %185 = vector.broadcast %184 : vector<8x1xf32> to vector<8x256xf32>
    %186 = arith.addf %183, %185 : vector<8x256xf32>
    %cst_143 = arith.constant 0.000000e+00 : f32
    %cst_144 = arith.constant 6.000000e+00 : f32
    %187 = vector.broadcast %cst_143 : f32 to vector<8x256xf32>
    %188 = arith.maximumf %187, %186 : vector<8x256xf32>
    %189 = vector.broadcast %cst_144 : f32 to vector<8x256xf32>
    %190 = arith.minimumf %189, %188 : vector<8x256xf32>
    %c0_145 = arith.constant 0 : index
    %c0_146 = arith.constant 0 : index
    %c0_147 = arith.constant 0 : index
    %191 = vector.load %arg12[%c0_145, %c0_146, %c0_147] : memref<1x8x256xf32, #tpu.memory_space<vmem>>, vector<1x8x256xf32>
    %192 = vector.shape_cast %191 : vector<1x8x256xf32> to vector<8x256xf32>
    %193 = vector.shape_cast %190 : vector<8x256xf32> to vector<1x8x256xf32>
    tpu.vector_store %arg12[%c0_145, %c0_146, %c0_147], %193 {strides = array<i32>} : memref<1x8x256xf32, #tpu.memory_space<vmem>>, vector<1x8x256xf32>,
    return
  }
  func.func @transform_0(%arg0: i32) -> (i32, i32, i32) {
    %c0_i32 = arith.constant 0 : i32
    %c0_i32_0 = arith.constant 0 : i32
    %c0_i32_1 = arith.constant 0 : i32
    return %arg0, %c0_i32, %c0_i32_0 : i32, i32, i32
  }
  func.func @transform_1(%arg0: i32) -> (i32, i32, i32) {
    %c0_i32 = arith.constant 0 : i32
    %c0_i32_0 = arith.constant 0 : i32
    %c0_i32_1 = arith.constant 0 : i32
    return %arg0, %c0_i32, %c0_i32_0 : i32, i32, i32
  }
  func.func @transform_2(%arg0: i32) -> (i32, i32) {
    %c0_i32 = arith.constant 0 : i32
    %c0_i32_0 = arith.constant 0 : i32
    %c0_i32_1 = arith.constant 0 : i32
    return %c0_i32, %c0_i32_0 : i32, i32
  }
  func.func @transform_3(%arg0: i32) -> (i32, i32) {
    %c0_i32 = arith.constant 0 : i32
    %c0_i32_0 = arith.constant 0 : i32
    %c0_i32_1 = arith.constant 0 : i32
    return %c0_i32, %c0_i32_0 : i32, i32
  }
  func.func @transform_4(%arg0: i32) -> (i32, i32) {
    %c0_i32 = arith.constant 0 : i32
    %c0_i32_0 = arith.constant 0 : i32
    %c0_i32_1 = arith.constant 0 : i32
    return %c0_i32, %c0_i32_0 : i32, i32
  }
  func.func @transform_5(%arg0: i32) -> (i32, i32) {
    %c0_i32 = arith.constant 0 : i32
    %c0_i32_0 = arith.constant 0 : i32
    %c0_i32_1 = arith.constant 0 : i32
    return %c0_i32, %c0_i32_0 : i32, i32
  }
  func.func @transform_6(%arg0: i32) -> (i32, i32) {
    %c0_i32 = arith.constant 0 : i32
    %c0_i32_0 = arith.constant 0 : i32
    %c0_i32_1 = arith.constant 0 : i32
    return %c0_i32, %c0_i32_0 : i32, i32
  }
  func.func @transform_7(%arg0: i32) -> (i32, i32) {
    %c0_i32 = arith.constant 0 : i32
    %c0_i32_0 = arith.constant 0 : i32
    %c0_i32_1 = arith.constant 0 : i32
    return %c0_i32, %c0_i32_0 : i32, i32
  }
  func.func @transform_8(%arg0: i32) -> (i32, i32) {
    %c0_i32 = arith.constant 0 : i32
    %c0_i32_0 = arith.constant 0 : i32
    %c0_i32_1 = arith.constant 0 : i32
    return %c0_i32, %c0_i32_0 : i32, i32
  }
  func.func @transform_9(%arg0: i32) -> (i32, i32) {
    %c0_i32 = arith.constant 0 : i32
    %c0_i32_0 = arith.constant 0 : i32
    %c0_i32_1 = arith.constant 0 : i32
    return %c0_i32, %c0_i32_0 : i32, i32
  }
  func.func @transform_10(%arg0: i32) -> (i32, i32) {
    %c0_i32 = arith.constant 0 : i32
    %c0_i32_0 = arith.constant 0 : i32
    %c0_i32_1 = arith.constant 0 : i32
    return %c0_i32, %c0_i32_0 : i32, i32
  }
  func.func @transform_11(%arg0: i32) -> (i32, i32, i32) {
    %c0_i32 = arith.constant 0 : i32
    %c0_i32_0 = arith.constant 0 : i32
    %c0_i32_1 = arith.constant 0 : i32
    return %arg0, %c0_i32, %c0_i32_0 : i32, i32, i32
  }
}

</mosaic_0001>

<llo_original>
// kernel: tpu_custom_call.1
$region0: #{tpu_custom_call.1}
  #allocation0 [shape = 'u32[]', space=smem, size = 0x4, offset = 0x4, fixed_abs, tag = 'smem constant byte address 0x4 - core index']
  #allocation1 [shape = 'u32[144,128]{1,0:T(1,128)}', space=vmem, size = 0x12000, scoped, tag = 'internal scratch']
  #allocation2 [shape = 'f32[4,290]{1,0:T(4,128)}', space=vmem, size = 0x1800, scoped, tag = 'scratch operand']
  #allocation3 [shape = 'bf16[36,256]{1,0:T(8,128)(2,1)}', space=vmem, size = 0x5000, scoped, tag = 'scratch operand']
  #allocation4 [shape = 'f32[1,1]{1,0:T(1,128)S(1)}', space=vmem, size = 0x200, scoped, tag = 'scoped memory for tpu_custom_call.1']
  #allocation5 [shape = 'f32[1,1]{1,0:T(1,128)S(1)}', space=vmem, size = 0x200, scoped, tag = 'scoped memory for tpu_custom_call.1']
  %s0 = inlined_call_operand.vmem [shape: f32[2,4,64], index: 0, kind: input, shape index: {}]
  %s1 = inlined_call_operand.vmem [shape: f32[2,4,256], index: 1, kind: input, shape index: {}]
  %s2 = inlined_call_operand.hbm [shape: f32[64,256], index: 2, kind: input, shape index: {}]
  %s3 = inlined_call_operand.hbm [shape: bf16[4,36], index: 3, kind: input, shape index: {}]
  %s4 = inlined_call_operand.vmem [shape: f32[4,1], index: 4, kind: input, shape index: {}]
  %s5 = inlined_call_operand.vmem [shape: bf16[4,36], index: 5, kind: input, shape index: {}]
  %s6 = inlined_call_operand.vmem [shape: f32[4,1], index: 6, kind: input, shape index: {}]
  %s7 = inlined_call_operand.vmem [shape: bf16[8,36], index: 7, kind: input, shape index: {}]
  %s8 = inlined_call_operand.vmem [shape: f32[8,1], index: 8, kind: input, shape index: {}]
  %s9 = inlined_call_operand.<no memory space> [shape: f32[1,1], index: 9, kind: input, shape index: {}]
  %s10 = inlined_call_operand.<no memory space> [shape: f32[1,1], index: 10, kind: input, shape index: {}]
  %s11 = inlined_call_operand.hbm [shape: f32[2,8,256], index: 11, kind: output, shape index: {}]
  %s12 = sld [smem:[#allocation0]]
  $region85: #{tpu_custom_call.1} parent=0
    _
  %s14 = ssub.s32 1, %s12
  %s15 = scalar_select 0, %s14, %s12
  %v16 = vstv %s9
  %17 = vst [vmem:[#allocation4] sm:$0x1] %v16
  %v18 = vstv %s10
  %19 = vst [vmem:[#allocation5] sm:$0x1] %v18
  $region1: #{tpu_custom_call.1} parent=0
    #allocation6 [shape = 'u8[65536]{0}', space=vmem, size = 0x10000, scoped, tag = 'input window, operand 2, single buffered']
    #allocation7 [shape = 's32[2]{0}', space=sflag, size = 0x8, scoped, tag = 'scoped memory for tpu_custom_call.1']
    #allocation8 [shape = 's32[2]{0}', space=sflag, size = 0x8, scoped, tag = 'scoped memory for tpu_custom_call.1']
    #allocation9 [shape = 'u8[1024]{0}', space=vmem, size = 0x400, scoped, tag = 'input window, operand 3, single buffered']
    #allocation10 [shape = 's32[1]{0}', space=sflag, size = 0x4, scoped, tag = 'scoped memory for tpu_custom_call.1']
    #allocation11 [shape = 'u8[16384]{0}', space=vmem, size = 0x4000, scoped, tag = 'output window, operand 0']
    %20 = vsyncpa [#allocation7], 0
    %21 = vsyncpa [#allocation10], 0
    %22 = vsyncpa [#allocation8], 0
    %s23 = scalar_lea.sflag [#allocation8], 1
    %24 = vsyncpa %s23, 0
    loop: start=0, step=1, limit=4
    $region2: #{tpu_custom_call.1} parent=1 // loop_pre_header
      _
    $region3: #{tpu_custom_call.1} parent=1 // loop_header
      %s26 = sphi 0, %s30
      %p27 = scmp.ge.s32.totalorder %s26, 4
      %s36 = sphi 0, %s38
      %s39 = sphi 0, %s36
      %s40 = sphi 0, %s39
      %s56 = sphi 0, %s40
      %s62 = sphi 0, %s64
      %s65 = sphi 0, %s62
      %s66 = sphi 0, %s65
      %s82 = sphi 0, %s66
      %s86 = sphi 0, %s86
      %s88 = sphi 0, %s86
      %s89 = sphi 0, %s88
      %s103 = sphi 0, %s89
      %s107 = sphi 0, %s107
      %s109 = sphi 0, %s107
      %s110 = sphi 0, %s109
      %s124 = sphi 0, %s110
      %s128 = sphi 0, %s128
      %s130 = sphi 0, %s128
      %s131 = sphi 0, %s130
      %s145 = sphi 0, %s131
      %s149 = sphi 0, %s149
      %s151 = sphi 0, %s149
      %s152 = sphi 0, %s151
      %s166 = sphi 0, %s152
      %s170 = sphi 0, %s170
      %s172 = sphi 0, %s170
      %s173 = sphi 0, %s172
      %s187 = sphi 0, %s173
      %s191 = sphi 0, %s191
      %s193 = sphi 0, %s191
      %s194 = sphi 0, %s193
      %s208 = sphi 0, %s194
      %s212 = sphi 0, %s212
      %s214 = sphi 0, %s212
      %s215 = sphi 0, %s214
      %s229 = sphi 0, %s215
      %s233 = sphi 0, %s233
      %s235 = sphi 0, %s233
      %s236 = sphi 0, %s235
      %s250 = sphi 0, %s236
      %s254 = sphi 0, %s254
      %s256 = sphi 0, %s254
      %s257 = sphi 0, %s256
      %s271 = sphi 0, %s257
      %s277 = sphi 0, %s279
      %s280 = sphi 0, %s277
      %s281 = sphi 0, %s280
      %s297 = sphi 0, %s281
    $region4: #{tpu_custom_call.1} parent=1 // loop_header_branch
      %29 = sbr.rel (%p27) target = $region8
    $region5: #{tpu_custom_call.1} parent=1 // loop_body
      %s31 = ssub.s32 %s26, 1
      %s32 = ssub.s32 %s26, 2
      %s33 = sadd.s32 %s26, 1
      %s34 = ssub.s32 %s26, %s33
      %p35 = scmp.eq.s32.totalorder %s34, 0
      %s37 = sadd.s32 %s36, 1
      %s38 = scalar_select %p35, %s36, %s37
      %p41 = pneg %p35
      %p42 = scmp.eq.s32.totalorder %s26, 1
      %p43 = por %p41, %p42
      %p44 = scmp.ne.s32.totalorder %s36, %s39
      %p45 = scmp.eq.s32.totalorder %s26, 0
      %p46 = por %p44, %p45
      %p47 = scmp.ne.s32.totalorder %s36, %s39
      %p48 = scmp.eq.s32.totalorder %s31, 1
      %p49 = por %p47, %p48
      %p50 = scmp.ne.s32.totalorder %s39, %s40
      %p51 = scmp.eq.s32.totalorder %s31, 0
      %p52 = por %p50, %p51
      %p53 = scmp.ne.s32.totalorder %s39, %s40
      %p54 = scmp.eq.s32.totalorder %s32, 1
      %p55 = por %p53, %p54
      %p57 = scmp.ne.s32.totalorder %s40, %s56
      %p58 = scmp.eq.s32.totalorder %s32, 0
      %p59 = por %p57, %p58
      %s60 = ssub.s32 %s26, %s33
      %p61 = scmp.eq.s32.totalorder %s60, 0
      %s63 = sadd.s32 %s62, 1
      %s64 = scalar_select %p61, %s62, %s63
      %p67 = pneg %p61
      %p68 = scmp.eq.s32.totalorder %s26, 1
      %p69 = por %p67, %p68
      %p70 = scmp.ne.s32.totalorder %s62, %s65
      %p71 = scmp.eq.s32.totalorder %s26, 0
      %p72 = por %p70, %p71
      %p73 = scmp.ne.s32.totalorder %s62, %s65
      %p74 = scmp.eq.s32.totalorder %s31, 1
      %p75 = por %p73, %p74
      %p76 = scmp.ne.s32.totalorder %s65, %s66
      %p77 = scmp.eq.s32.totalorder %s31, 0
      %p78 = por %p76, %p77
      %p79 = scmp.ne.s32.totalorder %s65, %s66
      %p80 = scmp.eq.s32.totalorder %s32, 1
      %p81 = por %p79, %p80
      %p83 = scmp.ne.s32.totalorder %s66, %s82
      %p84 = scmp.eq.s32.totalorder %s32, 0
      %p85 = por %p83, %p84
      %s87 = sadd.s32 %s86, 1
      %p90 = scmp.eq.s32.totalorder %s26, 1
      %p91 = scmp.ne.s32.totalorder %s86, %s88
      %p92 = scmp.eq.s32.totalorder %s26, 0
      %p93 = por %p91, %p92
      %p94 = scmp.ne.s32.totalorder %s86, %s88
      %p95 = scmp.eq.s32.totalorder %s31, 1
      %p96 = por %p94, %p95
      %p97 = scmp.ne.s32.totalorder %s88, %s89
      %p98 = scmp.eq.s32.totalorder %s31, 0
      %p99 = por %p97, %p98
      %p100 = scmp.ne.s32.totalorder %s88, %s89
      %p101 = scmp.eq.s32.totalorder %s32, 1
      %p102 = por %p100, %p101
      %p104 = scmp.ne.s32.totalorder %s89, %s103
      %p105 = scmp.eq.s32.totalorder %s32, 0
      %p106 = por %p104, %p105
      %s108 = sadd.s32 %s107, 1
      %p111 = scmp.eq.s32.totalorder %s26, 1
      %p112 = scmp.ne.s32.totalorder %s107, %s109
      %p113 = scmp.eq.s32.totalorder %s26, 0
      %p114 = por %p112, %p113
      %p115 = scmp.ne.s32.totalorder %s107, %s109
      %p116 = scmp.eq.s32.totalorder %s31, 1
      %p117 = por %p115, %p116
      %p118 = scmp.ne.s32.totalorder %s109, %s110
      %p119 = scmp.eq.s32.totalorder %s31, 0
      %p120 = por %p118, %p119
      %p121 = scmp.ne.s32.totalorder %s109, %s110
      %p122 = scmp.eq.s32.totalorder %s32, 1
      %p123 = por %p121, %p122
      %p125 = scmp.ne.s32.totalorder %s110, %s124
      %p126 = scmp.eq.s32.totalorder %s32, 0
      %p127 = por %p125, %p126
      %s129 = sadd.s32 %s128, 1
      %p132 = scmp.eq.s32.totalorder %s26, 1
      %p133 = scmp.ne.s32.totalorder %s128, %s130
      %p134 = scmp.eq.s32.totalorder %s26, 0
      %p135 = por %p133, %p134
      %p136 = scmp.ne.s32.totalorder %s128, %s130
      %p137 = scmp.eq.s32.totalorder %s31, 1
      %p138 = por %p136, %p137
      %p139 = scmp.ne.s32.totalorder %s130, %s131
      %p140 = scmp.eq.s32.totalorder %s31, 0
      %p141 = por %p139, %p140
      %p142 = scmp.ne.s32.totalorder %s130, %s131
      %p143 = scmp.eq.s32.totalorder %s32, 1
      %p144 = por %p142, %p143
      %p146 = scmp.ne.s32.totalorder %s131, %s145
      %p147 = scmp.eq.s32.totalorder %s32, 0
      %p148 = por %p146, %p147
      %s150 = sadd.s32 %s149, 1
      %p153 = scmp.eq.s32.totalorder %s26, 1
      %p154 = scmp.ne.s32.totalorder %s149, %s151
      %p155 = scmp.eq.s32.totalorder %s26, 0
      %p156 = por %p154, %p155
      %p157 = scmp.ne.s32.totalorder %s149, %s151
      %p158 = scmp.eq.s32.totalorder %s31, 1
      %p159 = por %p157, %p158
      %p160 = scmp.ne.s32.totalorder %s151, %s152
      %p161 = scmp.eq.s32.totalorder %s31, 0
      %p162 = por %p160, %p161
      %p163 = scmp.ne.s32.totalorder %s151, %s152
      %p164 = scmp.eq.s32.totalorder %s32, 1
      %p165 = por %p163, %p164
      %p167 = scmp.ne.s32.totalorder %s152, %s166
      %p168 = scmp.eq.s32.totalorder %s32, 0
      %p169 = por %p167, %p168
      %s171 = sadd.s32 %s170, 1
      %p174 = scmp.eq.s32.totalorder %s26, 1
      %p175 = scmp.ne.s32.totalorder %s170, %s172
      %p176 = scmp.eq.s32.totalorder %s26, 0
      %p177 = por %p175, %p176
      %p178 = scmp.ne.s32.totalorder %s170, %s172
      %p179 = scmp.eq.s32.totalorder %s31, 1
      %p180 = por %p178, %p179
      %p181 = scmp.ne.s32.totalorder %s172, %s173
      %p182 = scmp.eq.s32.totalorder %s31, 0
      %p183 = por %p181, %p182
      %p184 = scmp.ne.s32.totalorder %s172, %s173
      %p185 = scmp.eq.s32.totalorder %s32, 1
      %p186 = por %p184, %p185
      %p188 = scmp.ne.s32.totalorder %s173, %s187
      %p189 = scmp.eq.s32.totalorder %s32, 0
      %p190 = por %p188, %p189
      %s192 = sadd.s32 %s191, 1
      %p195 = scmp.eq.s32.totalorder %s26, 1
      %p196 = scmp.ne.s32.totalorder %s191, %s193
      %p197 = scmp.eq.s32.totalorder %s26, 0
      %p198 = por %p196, %p197
      %p199 = scmp.ne.s32.totalorder %s191, %s193
      %p200 = scmp.eq.s32.totalorder %s31, 1
      %p201 = por %p199, %p200
      %p202 = scmp.ne.s32.totalorder %s193, %s194
      %p203 = scmp.eq.s32.totalorder %s31, 0
      %p204 = por %p202, %p203
      %p205 = scmp.ne.s32.totalorder %s193, %s194
      %p206 = scmp.eq.s32.totalorder %s32, 1
      %p207 = por %p205, %p206
      %p209 = scmp.ne.s32.totalorder %s194, %s208
      %p210 = scmp.eq.s32.totalorder %s32, 0
      %p211 = por %p209, %p210
      %s213 = sadd.s32 %s212, 1
      %p216 = scmp.eq.s32.totalorder %s26, 1
      %p217 = scmp.ne.s32.totalorder %s212, %s214
      %p218 = scmp.eq.s32.totalorder %s26, 0
      %p219 = por %p217, %p218
      %p220 = scmp.ne.s32.totalorder %s212, %s214
      %p221 = scmp.eq.s32.totalorder %s31, 1
      %p222 = por %p220, %p221
      %p223 = scmp.ne.s32.totalorder %s214, %s215
      %p224 = scmp.eq.s32.totalorder %s31, 0
      %p225 = por %p223, %p224
      %p226 = scmp.ne.s32.totalorder %s214, %s215
      %p227 = scmp.eq.s32.totalorder %s32, 1
      %p228 = por %p226, %p227
      %p230 = scmp.ne.s32.totalorder %s215, %s229
      %p231 = scmp.eq.s32.totalorder %s32, 0
      %p232 = por %p230, %p231
      %s234 = sadd.s32 %s233, 1
      %p237 = scmp.eq.s32.totalorder %s26, 1
      %p238 = scmp.ne.s32.totalorder %s233, %s235
      %p239 = scmp.eq.s32.totalorder %s26, 0
      %p240 = por %p238, %p239
      %p241 = scmp.ne.s32.totalorder %s233, %s235
      %p242 = scmp.eq.s32.totalorder %s31, 1
      %p243 = por %p241, %p242
      %p244 = scmp.ne.s32.totalorder %s235, %s236
      %p245 = scmp.eq.s32.totalorder %s31, 0
      %p246 = por %p244, %p245
      %p247 = scmp.ne.s32.totalorder %s235, %s236
      %p248 = scmp.eq.s32.totalorder %s32, 1
      %p249 = por %p247, %p248
      %p251 = scmp.ne.s32.totalorder %s236, %s250
      %p252 = scmp.eq.s32.totalorder %s32, 0
      %p253 = por %p251, %p252
      %s255 = sadd.s32 %s254, 1
      %p258 = scmp.eq.s32.totalorder %s26, 1
      %p259 = scmp.ne.s32.totalorder %s254, %s256
      %p260 = scmp.eq.s32.totalorder %s26, 0
      %p261 = por %p259, %p260
      %p262 = scmp.ne.s32.totalorder %s254, %s256
      %p263 = scmp.eq.s32.totalorder %s31, 1
      %p264 = por %p262, %p263
      %p265 = scmp.ne.s32.totalorder %s256, %s257
      %p266 = scmp.eq.s32.totalorder %s31, 0
      %p267 = por %p265, %p266
      %p268 = scmp.ne.s32.totalorder %s256, %s257
      %p269 = scmp.eq.s32.totalorder %s32, 1
      %p270 = por %p268, %p269
      %p272 = scmp.ne.s32.totalorder %s257, %s271
      %p273 = scmp.eq.s32.totalorder %s32, 0
      %p274 = por %p272, %p273
      %s275 = ssub.s32 %s26, %s33
      %p276 = scmp.eq.s32.totalorder %s275, 0
      %s278 = sadd.s32 %s277, 1
      %s279 = scalar_select %p276, %s277, %s278
      %p282 = pneg %p276
      %p283 = scmp.eq.s32.totalorder %s26, 1
      %p284 = por %p282, %p283
      %p285 = scmp.ne.s32.totalorder %s277, %s280
      %p286 = scmp.eq.s32.totalorder %s26, 0
      %p287 = por %p285, %p286
      %p288 = scmp.ne.s32.totalorder %s277, %s280
      %p289 = scmp.eq.s32.totalorder %s31, 1
      %p290 = por %p288, %p289
      %p291 = scmp.ne.s32.totalorder %s280, %s281
      %p292 = scmp.eq.s32.totalorder %s31, 0
      %p293 = por %p291, %p292
      %p294 = scmp.ne.s32.totalorder %s280, %s281
      %p295 = scmp.eq.s32.totalorder %s32, 1
      %p296 = por %p294, %p295
      %p298 = scmp.ne.s32.totalorder %s281, %s297
      %p299 = scmp.eq.s32.totalorder %s32, 0
      %p300 = por %p298, %p299
      %p301 = scmp.le.s32.totalorder 1, %s26
      %p302 = scmp.lt.s32.totalorder %s26, 3
      %p303 = pnand %p301, %p302
      %p304 = pneg %p303
      // Predicated region
      $region9: #{tpu_custom_call.1} parent=5 // pred_check
        _
      $region10: #{tpu_custom_call.1} parent=5 // pred_check_branch
        %306 = sbr.rel (%p303) target = $region12
      $region11: #{tpu_custom_call.1} parent=5 // pred_region
        %s307 = ssub.s32 %s26, 1
        // Predicated region
        $region13: #{tpu_custom_call.1} parent=11 // pred_check
          %p308 = pneg %p99
        $region14: #{tpu_custom_call.1} parent=11 // pred_check_branch
          %310 = sbr.rel (%p308) target = $region16
        $region15: #{tpu_custom_call.1} parent=11 // pred_region
          %s312 = ssub.s32 2048, 2048
          %313 = vsyncadd [#allocation7], %s312
          %s314 = sshll.u32 [#allocation6], 4
          %s315 = int_to_ptr.vmem [resolvable:$true] %s314
          %320 = dma.hbm_to_vmem [thread:$0]  %s2, 2048, %s315, [#allocation7], 256, 256, 16
        $region16: #{tpu_custom_call.1} parent=11 // pred_fallthru
          _
        // Predicated region
        $region17: #{tpu_custom_call.1} parent=11 // pred_check
          %p321 = pneg %p120
        $region18: #{tpu_custom_call.1} parent=11 // pred_check_branch
          %323 = sbr.rel (%p321) target = $region20
        $region19: #{tpu_custom_call.1} parent=11 // pred_region
          %s325 = ssub.s32 32, 32
          %326 = vsyncadd [#allocation10], %s325
          %s328 = sshll.u32 [#allocation9], 4
          %s329 = int_to_ptr.vmem [resolvable:$true] %s328
          %331 = dma.hbm_to_vmem [thread:$0]  %s3, 32, %s329, [#allocation10]
        $region20: #{tpu_custom_call.1} parent=11 // pred_fallthru
          _
        // Predicated region
        $region21: #{tpu_custom_call.1} parent=11 // pred_check
          %p332 = pneg %p141
        $region22: #{tpu_custom_call.1} parent=11 // pred_check_branch
          %334 = sbr.rel (%p332) target = $region24
        $region23: #{tpu_custom_call.1} parent=11 // pred_region
          _
        $region24: #{tpu_custom_call.1} parent=11 // pred_fallthru
          _
        // Predicated region
        $region25: #{tpu_custom_call.1} parent=11 // pred_check
          %p335 = pneg %p162
        $region26: #{tpu_custom_call.1} parent=11 // pred_check_branch
          %337 = sbr.rel (%p335) target = $region28
        $region27: #{tpu_custom_call.1} parent=11 // pred_region
          _
        $region28: #{tpu_custom_call.1} parent=11 // pred_fallthru
          _
        // Predicated region
        $region29: #{tpu_custom_call.1} parent=11 // pred_check
          %p338 = pneg %p183
        $region30: #{tpu_custom_call.1} parent=11 // pred_check_branch
          %340 = sbr.rel (%p338) target = $region32
        $region31: #{tpu_custom_call.1} parent=11 // pred_region
          _
        $region32: #{tpu_custom_call.1} parent=11 // pred_fallthru
          _
        // Predicated region
        $region33: #{tpu_custom_call.1} parent=11 // pred_check
          %p341 = pneg %p204
        $region34: #{tpu_custom_call.1} parent=11 // pred_check_branch
          %343 = sbr.rel (%p341) target = $region36
        $region35: #{tpu_custom_call.1} parent=11 // pred_region
          _
        $region36: #{tpu_custom_call.1} parent=11 // pred_fallthru
          _
        // Predicated region
        $region37: #{tpu_custom_call.1} parent=11 // pred_check
          %p344 = pneg %p225
        $region38: #{tpu_custom_call.1} parent=11 // pred_check_branch
          %346 = sbr.rel (%p344) target = $region40
        $region39: #{tpu_custom_call.1} parent=11 // pred_region
          _
        $region40: #{tpu_custom_call.1} parent=11 // pred_fallthru
          _
        // Predicated region
        $region41: #{tpu_custom_call.1} parent=11 // pred_check
          %p347 = pneg %p246
        $region42: #{tpu_custom_call.1} parent=11 // pred_check_branch
          %349 = sbr.rel (%p347) target = $region44
        $region43: #{tpu_custom_call.1} parent=11 // pred_region
          _
        $region44: #{tpu_custom_call.1} parent=11 // pred_fallthru
          _
        // Predicated region
        $region45: #{tpu_custom_call.1} parent=11 // pred_check
          %p350 = pneg %p267
        $region46: #{tpu_custom_call.1} parent=11 // pred_check_branch
          %352 = sbr.rel (%p350) target = $region48
        $region47: #{tpu_custom_call.1} parent=11 // pred_region
          _
        $region48: #{tpu_custom_call.1} parent=11 // pred_fallthru
          _
      $region12: #{tpu_custom_call.1} parent=5 // pred_fallthru
        _
      %p353 = scmp.lt.s32.totalorder %s26, 2
      // Predicated region
      $region49: #{tpu_custom_call.1} parent=5 // pred_check
        %p354 = pneg %p353
      $region50: #{tpu_custom_call.1} parent=5 // pred_check_branch
        %356 = sbr.rel (%p354) target = $region52
      $region51: #{tpu_custom_call.1} parent=5 // pred_region
        // Predicated region
        $region53: #{tpu_custom_call.1} parent=51 // pred_check
          %p357 = pneg %p46
        $region54: #{tpu_custom_call.1} parent=51 // pred_check_branch
          %359 = sbr.rel (%p357) target = $region56
        $region55: #{tpu_custom_call.1} parent=51 // pred_region
          %p360 = scmp.lt.s32.totalorder %s26, 1
          %s361 = scalar_select %p360, %s26, 1
          %s362 = smul.addr %s361, 4
          %s363 = scalar_lea.vmem %s0, %s362
        $region56: #{tpu_custom_call.1} parent=51 // pred_fallthru
          _
        // Predicated region
        $region57: #{tpu_custom_call.1} parent=51 // pred_check
          %p364 = pneg %p72
        $region58: #{tpu_custom_call.1} parent=51 // pred_check_branch
          %366 = sbr.rel (%p364) target = $region60
        $region59: #{tpu_custom_call.1} parent=51 // pred_region
          %p367 = scmp.lt.s32.totalorder %s26, 1
          %s368 = scalar_select %p367, %s26, 1
          %s369 = smul.addr %s368, 2
          %s370 = smul.addr %s369, 4
          %s371 = scalar_lea.vmem %s1, %s370
        $region60: #{tpu_custom_call.1} parent=51 // pred_fallthru
          _
      $region52: #{tpu_custom_call.1} parent=5 // pred_fallthru
        _
      %p372 = scmp.le.s32.totalorder 1, %s26
      %p373 = scmp.lt.s32.totalorder %s26, 3
      %p374 = pnand %p372, %p373
      %p375 = pneg %p374
      // Predicated region
      $region61: #{tpu_custom_call.1} parent=5 // pred_check
        _
      $region62: #{tpu_custom_call.1} parent=5 // pred_check_branch
        %377 = sbr.rel (%p374) target = $region64
      $region63: #{tpu_custom_call.1} parent=5 // pred_region
        %s378 = ssub.s32 %s26, 1
        // Predicated region
        $region65: #{tpu_custom_call.1} parent=63 // pred_check
          %p379 = pneg %p99
        $region66: #{tpu_custom_call.1} parent=63 // pred_check_branch
          %381 = sbr.rel (%p379) target = $region68
        $region67: #{tpu_custom_call.1} parent=63 // pred_region
          %382 = dma.done [#allocation7], 2048
        $region68: #{tpu_custom_call.1} parent=63 // pred_fallthru
          _
        // Predicated region
        $region69: #{tpu_custom_call.1} parent=63 // pred_check
          %p383 = pneg %p120
        $region70: #{tpu_custom_call.1} parent=63 // pred_check_branch
          %385 = sbr.rel (%p383) target = $region72
        $region71: #{tpu_custom_call.1} parent=63 // pred_region
          %386 = dma.done [#allocation10], 32
        $region72: #{tpu_custom_call.1} parent=63 // pred_fallthru
          _
        %p387 = scmp.lt.s32.totalorder %s31, 1
        %s388 = scalar_select %p387, %s31, 1
        %s389 = smul.addr %s388, 4
        %s390 = scalar_lea.vmem %s0, %s389
        %p391 = pneg %p52
        %p392 = pneg %p49
        %p393 = scmp.lt.s32.totalorder %s31, 1
        %s394 = scalar_select %p393, %s31, 1
        %s395 = smul.addr %s394, 2
        %s396 = smul.addr %s395, 4
        %s397 = scalar_lea.vmem %s1, %s396
        %p398 = pneg %p78
        %p399 = pneg %p75
        %p400 = pneg %p99
        %p401 = pneg %p96
        %p402 = pneg %p120
        %p403 = pneg %p117
        %p404 = pneg %p141
        %p405 = pneg %p138
        %p406 = pneg %p162
        %p407 = pneg %p159
        %p408 = pneg %p183
        %p409 = pneg %p180
        %p410 = pneg %p204
        %p411 = pneg %p201
        %p412 = pneg %p225
        %p413 = pneg %p222
        %p414 = pneg %p246
        %p415 = pneg %p243
        %p416 = pneg %p267
        %p417 = pneg %p264
        %p418 = pneg %p293
        %p419 = pneg %p290
        %s420 = sand.u32 %s280, 1
        %s421 = scalar_lea.sflag [#allocation8], %s420
        %s422 = sand.u32 %s280, 1
        %s423 = smul.addr %s422, 16
        %s424 = scalar_lea.vmem [#allocation11], %s423
        %p425 = scmp.lt.s32.totalorder %s31, 1
        %s426 = scalar_select %p425, %s31, 1
        %s427 = smul.addr %s426, 4
        %s428 = scalar_lea.vmem %s0, %s427
        %p429 = scmp.lt.s32.totalorder %s31, 1
        %s430 = scalar_select %p429, %s31, 1
        %s431 = smul.addr %s430, 2
        %s432 = smul.addr %s431, 4
        %s433 = scalar_lea.vmem %s1, %s432
        %v435 = vlaneseq
        %v436 = vand.u32 %v435, 127
        %v437 = vadd.s32 %v436, 128
        %vm438 = vcmp.lt.s32.totalorder %v436, 0
        %v439 = vsub.s32 0, %v436
        %v440 = vsel %vm438, %v439, %v436
        %v441 = vshrl.u32 %v440, 4
        %v442 = vand.u32 %v440, 15
        %v443 = vsub.s32 0, %v442
        %v444 = vsel %vm438, %v443, %v442
        %vm445 = vcmp.lt.s32.totalorder %v437, 0
        %v446 = vsub.s32 0, %v437
        %v447 = vsel %vm445, %v446, %v437
        %v448 = vshrl.u32 %v447, 4
        %v449 = vand.u32 %v447, 15
        %v450 = vsub.s32 0, %v449
        %v451 = vsel %vm445, %v450, %v449
        %vm452 = vcmp.ne.s32.totalorder %v444, 0
        %vm453 = vcmp.ne.s32.totalorder %v451, 0
        %vm454 = vcmp.lt.s32.totalorder %v444, 0
        %vm455 = vcmp.lt.s32.totalorder %v451, 0
        %vm456 = vmand %vm454, %vm452
        %vm457 = vmand %vm455, %vm453
        %v458 = vadd.s32 %v444, 16
        %v459 = vadd.s32 %v451, 16
        %v460 = vsel %vm456, %v458, %v444
        %v461 = vsel %vm457, %v459, %v451
        %vm462 = vcmp.ne.s32.totalorder %v460, 0
        %vm463 = vcmp.ne.s32.totalorder %v461, 0
        %v464 = vsel %vm462, 1, 0
        %v465 = vsel %vm463, 1, 0
        %v466 = vcvt.s32.f32 %v464
        %v467 = vcvt.s32.f32 %v465
        %vm468 = vcmp.ne.s32.totalorder %v460, 15
        %vm469 = vcmp.ne.s32.totalorder %v461, 15
        %v470 = vsel %vm468, 1, 0
        %v471 = vsel %vm469, 1, 0
        %v472 = vcvt.s32.f32 %v470
        %v473 = vcvt.s32.f32 %v471
        %474 = vst [vmem:[#allocation2] sm:$0xff] 0.0
        %vm475 = vcmask 273408
        %476 = vst.msk [vmem:[#allocation2 + $0x8] sm:$0xf] %vm475, 0.0
        %v477 = vld [vmem:[%s428] sm:$0xf]
        %v478 = vld [vmem:[#allocation6] sm:$0xff]
        %v479 = vld [vmem:[#allocation6 + $0x8] sm:$0xff]
        %v480 = vld [vmem:[#allocation6 + $0x10] sm:$0xff]
        %v481 = vld [vmem:[#allocation6 + $0x18] sm:$0xff]
        %v482 = vld [vmem:[#allocation6 + $0x20] sm:$0xff]
        %v483 = vld [vmem:[#allocation6 + $0x28] sm:$0xff]
        %v484 = vld [vmem:[#allocation6 + $0x30] sm:$0xff]
        %v485 = vld [vmem:[#allocation6 + $0x38] sm:$0xff]
        %v486 = vld [vmem:[#allocation6 + $0x40] sm:$0xff]
        %v487 = vld [vmem:[#allocation6 + $0x48] sm:$0xff]
        %v488 = vld [vmem:[#allocation6 + $0x50] sm:$0xff]
        %v489 = vld [vmem:[#allocation6 + $0x58] sm:$0xff]
        %v490 = vld [vmem:[#allocation6 + $0x60] sm:$0xff]
        %v491 = vld [vmem:[#allocation6 + $0x68] sm:$0xff]
        %v492 = vld [vmem:[#allocation6 + $0x70] sm:$0xff]
        %v493 = vld [vmem:[#allocation6 + $0x78] sm:$0xff]
        %vm494 = vcmask 523264
        %v496 = vsel %vm494, %v477, 0
        %498 = vmatprep.subr.mxu0 0.0
        %499 = vmatpush1.msra.mxu0 0.0
        %500 = vmatprep.subr.mxu0 0.0
        %501 = vmatpush1.msra.mxu0 0.0
        %502 = vmatprep.subr.mxu0 0.0
        %503 = vmatpush1.msra.mxu0 0.0
        %504 = vmatprep.subr.mxu0 0.0
        %505 = vmatpush1.msra.mxu0 0.0
        %506 = vmatprep.subr.mxu0 0.0
        %507 = vmatpush1.msra.mxu0 0.0
        %508 = vmatprep.subr.mxu0 0.0
        %509 = vmatpush1.msra.mxu0 0.0
        %510 = vmatprep.subr.mxu0 0.0
        %511 = vmatpush1.msra.mxu0 0.0
        %512 = vmatprep.subr.mxu0 0.0
        %513 = vmatpush1.msra.mxu0 0.0
        %514 = vmatprep.subr.mxu0 %v493
        %515 = vmatpush1.msra.mxu0 %v492
        %516 = vmatprep.subr.mxu0 %v491
        %517 = vmatpush1.msra.mxu0 %v490
        %518 = vmatprep.subr.mxu0 %v489
        %519 = vmatpush1.msra.mxu0 %v488
        %520 = vmatprep.subr.mxu0 %v487
        %521 = vmatpush1.msra.mxu0 %v486
        %522 = vmatprep.subr.mxu0 %v485
        %523 = vmatpush1.msra.mxu0 %v484
        %524 = vmatprep.subr.mxu0 %v483
        %525 = vmatpush1.msra.mxu0 %v482
        %526 = vmatprep.subr.mxu0 %v481
        %527 = vmatpush1.msra.mxu0 %v480
        %528 = vmatprep.subr.mxu0 %v479
        %529 = vmatpush1.msra.mxu0 %v478
        %530 = vmatprep.subr.mxu0 0.0
        %531 = vmatpush2.msra.mxu0 0.0
        %532 = vmatprep.subr.mxu0 0.0
        %533 = vmatpush2.msra.mxu0 0.0
        %534 = vmatprep.subr.mxu0 0.0
        %535 = vmatpush2.msra.mxu0 0.0
        %536 = vmatprep.subr.mxu0 0.0
        %537 = vmatpush2.msra.mxu0 0.0
        %538 = vmatprep.subr.mxu0 0.0
        %539 = vmatpush2.msra.mxu0 0.0
        %540 = vmatprep.subr.mxu0 0.0
        %541 = vmatpush2.msra.mxu0 0.0
        %542 = vmatprep.subr.mxu0 0.0
        %543 = vmatpush2.msra.mxu0 0.0
        %544 = vmatprep.subr.mxu0 0.0
        %545 = vmatpush2.msra.mxu0 0.0
        %546 = vmatprep.subr.mxu0 0.0
        %547 = vmatpush2.msra.mxu0 0.0
        %548 = vmatprep.subr.mxu0 0.0
        %549 = vmatpush2.msra.mxu0 0.0
        %550 = vmatprep.subr.mxu0 0.0
        %551 = vmatpush2.msra.mxu0 0.0
        %552 = vmatprep.subr.mxu0 0.0
        %553 = vmatpush2.msra.mxu0 0.0
        %554 = vmatprep.subr.mxu0 0.0
        %555 = vmatpush2.msra.mxu0 0.0
        %556 = vmatprep.subr.mxu0 0.0
        %557 = vmatpush2.msra.mxu0 0.0
        %558 = vmatprep.subr.mxu0 0.0
        %559 = vmatpush2.msra.mxu0 0.0
        %560 = vmatprep.subr.mxu0 0.0
        %561 = vmatpush2.msra.mxu0 0.0
        %562 = vmatprep.mubr.f32.mxu0 0.0
        %563 = vmatmul.mubr.f32.gmra.mxu0 %v496
        %v564 = vpop.f32.mrf.mxu0
        %v565 = vadd.f32 0.0, %v564
        %v566 = vpop.f32.mrf.mxu0
        %v567 = vadd.f32 0.0, %v566
        %568 = vdwg.mxu0
        %v569 = vld [vmem:[%s433] sm:$0xff]
        %571 = vrot.lane.b32.xlu0 %v569, 17
        %v572 = vpop.permute.xlu0 %571
        %v573 = vrot.slane %v572, 4
        %vm574 = vcmask 138240
        %v575 = vsel %vm574, %v573, %v572
        %vm578 = vcmask 1043592
        %vm579 = vcmask 1047556
        %vm580 = vmor %vm579, %vm578
        %581 = vst.msk [vmem:[#allocation2] sm:$0xff] %vm580, %v575
        %vm582 = vcmask 134144
        %583 = vst.msk [vmem:[#allocation2 + $0x8] sm:$0xf] %vm582, %v573
        %v584 = vld [vmem:[#allocation2] sm:$0xff]
        %v587 = vcombine.low %v466, %v467
        %v589 = vmul.f32 %v584, %v587
        %v591 = vcombine.high %v589, %v589
        %v593 = vpack.c.bf16 %v589, %v589
        %v594 = vpack.c.bf16 %v591, %v591
        %v597 = vunpack.c.l.b16 %v593
        %v598 = vunpack.c.l.b16 %v594
        %v599 = vpack.c.b16 %v598, %v597
        %601 = vst [vmem:[#allocation3] sm:$0x33] %v599
        %v602 = vld [vmem:[#allocation2] sm:$0xff]
        %v603 = vld [vmem:[#allocation2 + $0x8] sm:$0xf]
        %v605 = vcombine.high %v602, %v602
        %v607 = vpack.c.bf16 %v602, %v602
        %v608 = vpack.c.bf16 %v605, %v605
        %v609 = vpack.c.bf16 %v603, %v603
        %v613 = vunpack.c.l.b16 %v607
        %v614 = vunpack.c.l.b16 %v608
        %v615 = vunpack.c.l.b16 %v609
        %v616 = vpack.c.b16 %v614, %v613
        %v617 = vpack.c.b16 %v615, %v615
        %v618 = vrot.slane %v616, 6
        %v619 = vrot.slane %v617, 6
        %620 = vrot.lane.b32.xlu0 %v618, 127
        %v621 = vpop.permute.xlu0 %620
        %622 = vrot.lane.b32.xlu0 %v619, 127
        %v623 = vpop.permute.xlu0 %622
        %v624 = vrot.slane %v621, 4
        %v625 = vrot.slane %v623, 4
        %vm626 = vcmask 1043456
        %v627 = vsel %vm626, %v624, %v625
        %vm628 = vcmask 1039360
        %v629 = vsel %vm628, %v621, %v627
        %631 = vst [vmem:[#allocation3] sm:$0xcc] %v629
        %v632 = vld [vmem:[#allocation2] sm:$0xff]
        %v633 = vld [vmem:[#allocation2 + $0x8] sm:$0xf]
        %v636 = vcombine.low %v472, %v473
        %637 = vrot.lane.b32.xlu0 %v636, 2
        %v638 = vpop.permute.xlu0 %637
        %v639 = vrot.slane %v638, 4
        %vm640 = vcmask 15360
        %v641 = vsel %vm640, %v639, %v638
        %v644 = vmul.f32 %v632, %v641
        %v645 = vmul.f32 %v633, %v639
        %v647 = vcombine.high %v644, %v644
        %v649 = vpack.c.bf16 %v644, %v644
        %v650 = vpack.c.bf16 %v647, %v647
        %v651 = vpack.c.bf16 %v645, %v645
        %v655 = vunpack.c.l.b16 %v649
        %v656 = vunpack.c.l.b16 %v650
        %v657 = vunpack.c.l.b16 %v651
        %v658 = vpack.c.b16 %v656, %v655
        %v659 = vpack.c.b16 %v657, %v657
        %660 = vrot.lane.b32.xlu0 %v658, 126
        %v661 = vpop.permute.xlu0 %660
        %662 = vrot.lane.b32.xlu0 %v659, 126
        %v663 = vpop.permute.xlu0 %662
        %v664 = vrot.slane %v661, 4
        %v665 = vrot.slane %v663, 4
        %v666 = vsel %vm626, %v664, %v665
        %vm667 = vcmask 1031168
        %v668 = vsel %vm667, %v661, %v666
        %670 = vst [vmem:[#allocation3 + $0x8] sm:$0x33] %v668
        %v671 = vld [vmem:[#allocation2] sm:$0xff]
        %v672 = vld [vmem:[#allocation2 + $0x8] sm:$0xf]
        %673 = vrot.lane.b32.xlu0 %v587, 16
        %v674 = vpop.permute.xlu0 %673
        %v675 = vrot.slane %v674, 4
        %vm676 = vcmask 130048
        %v677 = vsel %vm676, %v675, %v674
        %v680 = vmul.f32 %v671, %v677
        %v681 = vmul.f32 %v672, %v675
        %v683 = vcombine.high %v680, %v680
        %v685 = vpack.c.bf16 %v680, %v680
        %v686 = vpack.c.bf16 %v683, %v683
        %v687 = vpack.c.bf16 %v681, %v681
        %v691 = vunpack.c.l.b16 %v685
        %v692 = vunpack.c.l.b16 %v686
        %v693 = vunpack.c.l.b16 %v687
        %v694 = vpack.c.b16 %v692, %v691
        %v695 = vpack.c.b16 %v693, %v693
        %v696 = vrot.slane %v694, 6
        %v697 = vrot.slane %v695, 6
        %698 = vrot.lane.b32.xlu0 %v696, 112
        %v699 = vpop.permute.xlu0 %698
        %700 = vrot.lane.b32.xlu0 %v697, 112
        %v701 = vpop.permute.xlu0 %700
        %v702 = vrot.slane %v699, 4
        %v703 = vrot.slane %v701, 4
        %v704 = vsel %vm626, %v702, %v703
        %vm705 = vcmask 916480
        %v706 = vsel %vm705, %v699, %v704
        %708 = vst [vmem:[#allocation3 + $0x8] sm:$0xcc] %v706
        %v709 = vld [vmem:[#allocation2] sm:$0xff]
        %v710 = vld [vmem:[#allocation2 + $0x8] sm:$0xf]
        %v712 = vcombine.high %v709, %v709
        %v714 = vpack.c.bf16 %v709, %v709
        %v715 = vpack.c.bf16 %v712, %v712
        %v716 = vpack.c.bf16 %v710, %v710
        %v720 = vunpack.c.l.b16 %v714
        %v721 = vunpack.c.l.b16 %v715
        %v722 = vunpack.c.l.b16 %v716
        %v723 = vpack.c.b16 %v721, %v720
        %v724 = vpack.c.b16 %v722, %v722
        %725 = vrot.lane.b32.xlu0 %v723, 111
        %v726 = vpop.permute.xlu0 %725
        %727 = vrot.lane.b32.xlu0 %v724, 111
        %v728 = vpop.permute.xlu0 %727
        %v729 = vrot.slane %v726, 4
        %v730 = vrot.slane %v728, 4
        %v731 = vsel %vm626, %v729, %v730
        %vm732 = vcmask 908288
        %v733 = vsel %vm732, %v726, %v731
        %735 = vst [vmem:[#allocation3 + $0x10] sm:$0x33] %v733
        %v736 = vld [vmem:[#allocation2] sm:$0xff]
        %v737 = vld [vmem:[#allocation2 + $0x8] sm:$0xf]
        %738 = vrot.lane.b32.xlu0 %v636, 18
        %v739 = vpop.permute.xlu0 %738
        %v740 = vrot.slane %v739, 4
        %vm741 = vcmask 146432
        %v742 = vsel %vm741, %v740, %v739
        %v745 = vmul.f32 %v736, %v742
        %v746 = vmul.f32 %v737, %v740
        %v748 = vcombine.high %v745, %v745
        %v750 = vpack.c.bf16 %v745, %v745
        %v751 = vpack.c.bf16 %v748, %v748
        %v752 = vpack.c.bf16 %v746, %v746
        %v756 = vunpack.c.l.b16 %v750
        %v757 = vunpack.c.l.b16 %v751
        %v758 = vunpack.c.l.b16 %v752
        %v759 = vpack.c.b16 %v757, %v756
        %v760 = vpack.c.b16 %v758, %v758
        %v761 = vrot.slane %v759, 6
        %v762 = vrot.slane %v760, 6
        %763 = vrot.lane.b32.xlu0 %v761, 110
        %v764 = vpop.permute.xlu0 %763
        %765 = vrot.lane.b32.xlu0 %v762, 110
        %v766 = vpop.permute.xlu0 %765
        %v767 = vrot.slane %v764, 4
        %v768 = vrot.slane %v766, 4
        %v769 = vsel %vm626, %v767, %v768
        %vm770 = vcmask 900096
        %v771 = vsel %vm770, %v764, %v769
        %773 = vst [vmem:[#allocation3 + $0x10] sm:$0xcc] %v771
        %v774 = vld [vmem:[#allocation2] sm:$0xff]
        %v775 = vld [vmem:[#allocation2 + $0x8] sm:$0xf]
        %776 = vrot.lane.b32.xlu0 %v587, 32
        %v777 = vpop.permute.xlu0 %776
        %v778 = vrot.slane %v777, 4
        %vm779 = vcmask 261120
        %v780 = vsel %vm779, %v778, %v777
        %v783 = vmul.f32 %v774, %v780
        %v784 = vmul.f32 %v775, %v778
        %v786 = vcombine.high %v783, %v783
        %v788 = vpack.c.bf16 %v783, %v783
        %v789 = vpack.c.bf16 %v786, %v786
        %v790 = vpack.c.bf16 %v784, %v784
        %v794 = vunpack.c.l.b16 %v788
        %v795 = vunpack.c.l.b16 %v789
        %v796 = vunpack.c.l.b16 %v790
        %v797 = vpack.c.b16 %v795, %v794
        %v798 = vpack.c.b16 %v796, %v796
        %799 = vrot.lane.b32.xlu0 %v797, 96
        %v800 = vpop.permute.xlu0 %799
        %801 = vrot.lane.b32.xlu0 %v798, 96
        %v802 = vpop.permute.xlu0 %801
        %v803 = vrot.slane %v800, 4
        %v804 = vrot.slane %v802, 4
        %v805 = vsel %vm626, %v803, %v804
        %vm806 = vcmask 785408
        %v807 = vsel %vm806, %v800, %v805
        %809 = vst [vmem:[#allocation3 + $0x18] sm:$0x33] %v807
        %v810 = vld [vmem:[#allocation2] sm:$0xff]
        %v811 = vld [vmem:[#allocation2 + $0x8] sm:$0xf]
        %v813 = vcombine.high %v810, %v810
        %v815 = vpack.c.bf16 %v810, %v810
        %v816 = vpack.c.bf16 %v813, %v813
        %v817 = vpack.c.bf16 %v811, %v811
        %v821 = vunpack.c.l.b16 %v815
        %v822 = vunpack.c.l.b16 %v816
        %v823 = vunpack.c.l.b16 %v817
        %v824 = vpack.c.b16 %v822, %v821
        %v825 = vpack.c.b16 %v823, %v823
        %v826 = vrot.slane %v824, 6
        %v827 = vrot.slane %v825, 6
        %828 = vrot.lane.b32.xlu0 %v826, 95
        %v829 = vpop.permute.xlu0 %828
        %830 = vrot.lane.b32.xlu0 %v827, 95
        %v831 = vpop.permute.xlu0 %830
        %v832 = vrot.slane %v829, 4
        %v833 = vrot.slane %v831, 4
        %v834 = vsel %vm626, %v832, %v833
        %vm835 = vcmask 777216
        %v836 = vsel %vm835, %v829, %v834
        %838 = vst [vmem:[#allocation3 + $0x18] sm:$0xcc] %v836
        %v839 = vld [vmem:[#allocation2] sm:$0xff]
        %v840 = vld [vmem:[#allocation2 + $0x8] sm:$0xf]
        %841 = vrot.lane.b32.xlu0 %v636, 34
        %v842 = vpop.permute.xlu0 %841
        %v843 = vrot.slane %v842, 4
        %vm844 = vcmask 277504
        %v845 = vsel %vm844, %v843, %v842
        %v848 = vmul.f32 %v839, %v845
        %v849 = vmul.f32 %v840, %v843
        %v851 = vcombine.high %v848, %v848
        %v853 = vpack.c.bf16 %v848, %v848
        %v854 = vpack.c.bf16 %v851, %v851
        %v855 = vpack.c.bf16 %v849, %v849
        %v859 = vunpack.c.l.b16 %v853
        %v860 = vunpack.c.l.b16 %v854
        %v861 = vunpack.c.l.b16 %v855
        %v862 = vpack.c.b16 %v860, %v859
        %v863 = vpack.c.b16 %v861, %v861
        %864 = vrot.lane.b32.xlu0 %v862, 94
        %v865 = vpop.permute.xlu0 %864
        %866 = vrot.lane.b32.xlu0 %v863, 94
        %v867 = vpop.permute.xlu0 %866
        %v868 = vrot.slane %v865, 4
        %v869 = vrot.slane %v867, 4
        %v870 = vsel %vm626, %v868, %v869
        %vm871 = vcmask 769024
        %v872 = vsel %vm871, %v865, %v870
        %874 = vst [vmem:[#allocation3 + $0x20] sm:$0x33] %v872
        %v875 = vld [vmem:[#allocation9] sm:$0x3]
        %v876 = vld [vmem:[#allocation3] sm:$0xff]
        %v877 = vld [vmem:[#allocation3 + $0x8] sm:$0xff]
        %v878 = vld [vmem:[#allocation3 + $0x10] sm:$0xff]
        %v879 = vld [vmem:[#allocation3 + $0x18] sm:$0xff]
        %v880 = vld [vmem:[#allocation3 + $0x20] sm:$0x33]
        %v881 = vld [vmem:[%s4] sm:$0xf]
        %883 = vset.pattern.permute.xlu0 0
        %884 = vperm.xlu0 %883, %v881
        %v885 = vpop.permute.xlu0 %884
        %v892 = vunpack.c.l.b16 %v876
        %v893 = vunpack.c.h.b16 %v876
        %v894 = vunpack.c.l.b16 %v877
        %v895 = vunpack.c.h.b16 %v877
        %v896 = vunpack.c.l.b16 %v878
        %v897 = vunpack.c.h.b16 %v878
        %v898 = vunpack.c.l.b16 %v879
        %v899 = vunpack.c.h.b16 %v879
        %v900 = vunpack.c.l.b16 %v880
        %v901 = vunpack.c.h.b16 %v880
        %v902 = vpack.c.b16 %v894, %v892
        %v903 = vpack.c.b16 %v895, %v893
        %v904 = vpack.c.b16 %v898, %v896
        %v905 = vpack.c.b16 %v899, %v897
        %v906 = vpack.c.b16 %v900, %v900
        %v907 = vpack.c.b16 %v901, %v901
        %vm912 = vcmask 293888
        %v914 = vsel %vm912, %v875, 0
        %vm916 = vcmask 1041408
        %v918 = vsel %vm916, %v906, 0
        %v921 = vsel %vm916, %v907, 0
        %923 = vmatprep.subr.bf16.mxu0 0
        %924 = vmatpush1.bf16.msra.mxu0 0
        %925 = vmatprep.subr.bf16.mxu0 0
        %926 = vmatpush1.bf16.msra.mxu0 0
        %927 = vmatprep.subr.bf16.mxu0 0
        %928 = vmatpush1.bf16.msra.mxu0 0
        %929 = vmatprep.subr.bf16.mxu0 0
        %930 = vmatpush1.bf16.msra.mxu0 0
        %931 = vmatprep.subr.bf16.mxu0 0
        %932 = vmatpush1.bf16.msra.mxu0 0
        %933 = vmatprep.subr.bf16.mxu0 %v921
        %934 = vmatpush1.bf16.msra.mxu0 %v918
        %935 = vmatprep.subr.bf16.mxu0 %v905
        %936 = vmatpush1.bf16.msra.mxu0 %v904
        %937 = vmatprep.subr.bf16.mxu0 %v903
        %938 = vmatpush1.bf16.msra.mxu0 %v902
        %939 = vmatprep.subr.bf16.mxu0 0
        %940 = vmatpush2.bf16.msra.mxu0 0
        %941 = vmatprep.subr.bf16.mxu0 0
        %942 = vmatpush2.bf16.msra.mxu0 0
        %943 = vmatprep.subr.bf16.mxu0 0
        %944 = vmatpush2.bf16.msra.mxu0 0
        %945 = vmatprep.subr.bf16.mxu0 0
        %946 = vmatpush2.bf16.msra.mxu0 0
        %947 = vmatprep.subr.bf16.mxu0 0
        %948 = vmatpush2.bf16.msra.mxu0 0
        %949 = vmatprep.subr.bf16.mxu0 0
        %950 = vmatpush2.bf16.msra.mxu0 0
        %951 = vmatprep.subr.bf16.mxu0 0
        %952 = vmatpush2.bf16.msra.mxu0 0
        %953 = vmatprep.subr.bf16.mxu0 0
        %954 = vmatpush2.bf16.msra.mxu0 0
        %955 = vmatprep.mubr.bf16.mxu0 0
        %956 = vmatmul.mubr.bf16.gmra.mxu0 %v914
        %v957 = vpop.f32.mrf.mxu0
        %v958 = vadd.f32 %v885, %v957
        %v959 = vpop.f32.mrf.mxu0
        %v960 = vadd.f32 %v885, %v959
        %v961 = vpop.f32.mrf.mxu0
        %v962 = vpop.f32.mrf.mxu0
        %963 = vdwg.mxu0
        %v964 = vmax.f32 %v958, 0.0
        %v965 = vmax.f32 %v960, 0.0
        %v966 = vmin.f32 %v964, 6.0
        %v967 = vmin.f32 %v965, 6.0
        %v970 = vcombine.low %v565, %v567
        %971 = vrot.lane.b32.xlu0 %v970, 17
        %v972 = vpop.permute.xlu0 %971
        %v973 = vrot.slane %v972, 4
        %v974 = vsel %vm574, %v973, %v972
        %977 = vst.msk [vmem:[#allocation2] sm:$0xff] %vm580, %v974
        %978 = vst.msk [vmem:[#allocation2 + $0x8] sm:$0xf] %vm582, %v973
        %v979 = vld [vmem:[#allocation2] sm:$0xff]
        %v980 = vmul.f32 %v979, %v587
        %v982 = vcombine.high %v980, %v980
        %v984 = vpack.c.bf16 %v980, %v980
        %v985 = vpack.c.bf16 %v982, %v982
        %v988 = vunpack.c.l.b16 %v984
        %v989 = vunpack.c.l.b16 %v985
        %v990 = vpack.c.b16 %v989, %v988
        %992 = vst [vmem:[#allocation3] sm:$0x33] %v990
        %v993 = vld [vmem:[#allocation2] sm:$0xff]
        %v994 = vld [vmem:[#allocation2 + $0x8] sm:$0xf]
        %v996 = vcombine.high %v993, %v993
        %v998 = vpack.c.bf16 %v993, %v993
        %v999 = vpack.c.bf16 %v996, %v996
        %v1000 = vpack.c.bf16 %v994, %v994
        %v1004 = vunpack.c.l.b16 %v998
        %v1005 = vunpack.c.l.b16 %v999
        %v1006 = vunpack.c.l.b16 %v1000
        %v1007 = vpack.c.b16 %v1005, %v1004
        %v1008 = vpack.c.b16 %v1006, %v1006
        %v1009 = vrot.slane %v1007, 6
        %v1010 = vrot.slane %v1008, 6
        %1011 = vrot.lane.b32.xlu0 %v1009, 127
        %v1012 = vpop.permute.xlu0 %1011
        %1013 = vrot.lane.b32.xlu0 %v1010, 127
        %v1014 = vpop.permute.xlu0 %1013
        %v1015 = vrot.slane %v1012, 4
        %v1016 = vrot.slane %v1014, 4
        %v1017 = vsel %vm626, %v1015, %v1016
        %v1018 = vsel %vm628, %v1012, %v1017
        %1020 = vst [vmem:[#allocation3] sm:$0xcc] %v1018
        %v1021 = vld [vmem:[#allocation2] sm:$0xff]
        %v1022 = vld [vmem:[#allocation2 + $0x8] sm:$0xf]
        %v1023 = vmul.f32 %v1021, %v641
        %v1024 = vmul.f32 %v1022, %v639
        %v1026 = vcombine.high %v1023, %v1023
        %v1028 = vpack.c.bf16 %v1023, %v1023
        %v1029 = vpack.c.bf16 %v1026, %v1026
        %v1030 = vpack.c.bf16 %v1024, %v1024
        %v1034 = vunpack.c.l.b16 %v1028
        %v1035 = vunpack.c.l.b16 %v1029
        %v1036 = vunpack.c.l.b16 %v1030
        %v1037 = vpack.c.b16 %v1035, %v1034
        %v1038 = vpack.c.b16 %v1036, %v1036
        %1039 = vrot.lane.b32.xlu0 %v1037, 126
        %v1040 = vpop.permute.xlu0 %1039
        %1041 = vrot.lane.b32.xlu0 %v1038, 126
        %v1042 = vpop.permute.xlu0 %1041
        %v1043 = vrot.slane %v1040, 4
        %v1044 = vrot.slane %v1042, 4
        %v1045 = vsel %vm626, %v1043, %v1044
        %v1046 = vsel %vm667, %v1040, %v1045
        %1048 = vst [vmem:[#allocation3 + $0x8] sm:$0x33] %v1046
        %v1049 = vld [vmem:[#allocation2] sm:$0xff]
        %v1050 = vld [vmem:[#allocation2 + $0x8] sm:$0xf]
        %v1051 = vmul.f32 %v1049, %v677
        %v1052 = vmul.f32 %v1050, %v675
        %v1054 = vcombine.high %v1051, %v1051
        %v1056 = vpack.c.bf16 %v1051, %v1051
        %v1057 = vpack.c.bf16 %v1054, %v1054
        %v1058 = vpack.c.bf16 %v1052, %v1052
        %v1062 = vunpack.c.l.b16 %v1056
        %v1063 = vunpack.c.l.b16 %v1057
        %v1064 = vunpack.c.l.b16 %v1058
        %v1065 = vpack.c.b16 %v1063, %v1062
        %v1066 = vpack.c.b16 %v1064, %v1064
        %v1067 = vrot.slane %v1065, 6
        %v1068 = vrot.slane %v1066, 6
        %1069 = vrot.lane.b32.xlu0 %v1067, 112
        %v1070 = vpop.permute.xlu0 %1069
        %1071 = vrot.lane.b32.xlu0 %v1068, 112
        %v1072 = vpop.permute.xlu0 %1071
        %v1073 = vrot.slane %v1070, 4
        %v1074 = vrot.slane %v1072, 4
        %v1075 = vsel %vm626, %v1073, %v1074
        %v1076 = vsel %vm705, %v1070, %v1075
        %1078 = vst [vmem:[#allocation3 + $0x8] sm:$0xcc] %v1076
        %v1079 = vld [vmem:[#allocation2] sm:$0xff]
        %v1080 = vld [vmem:[#allocation2 + $0x8] sm:$0xf]
        %v1082 = vcombine.high %v1079, %v1079
        %v1084 = vpack.c.bf16 %v1079, %v1079
        %v1085 = vpack.c.bf16 %v1082, %v1082
        %v1086 = vpack.c.bf16 %v1080, %v1080
        %v1090 = vunpack.c.l.b16 %v1084
        %v1091 = vunpack.c.l.b16 %v1085
        %v1092 = vunpack.c.l.b16 %v1086
        %v1093 = vpack.c.b16 %v1091, %v1090
        %v1094 = vpack.c.b16 %v1092, %v1092
        %1095 = vrot.lane.b32.xlu0 %v1093, 111
        %v1096 = vpop.permute.xlu0 %1095
        %1097 = vrot.lane.b32.xlu0 %v1094, 111
        %v1098 = vpop.permute.xlu0 %1097
        %v1099 = vrot.slane %v1096, 4
        %v1100 = vrot.slane %v1098, 4
        %v1101 = vsel %vm626, %v1099, %v1100
        %v1102 = vsel %vm732, %v1096, %v1101
        %1104 = vst [vmem:[#allocation3 + $0x10] sm:$0x33] %v1102
        %v1105 = vld [vmem:[#allocation2] sm:$0xff]
        %v1106 = vld [vmem:[#allocation2 + $0x8] sm:$0xf]
        %v1107 = vmul.f32 %v1105, %v742
        %v1108 = vmul.f32 %v1106, %v740
        %v1110 = vcombine.high %v1107, %v1107
        %v1112 = vpack.c.bf16 %v1107, %v1107
        %v1113 = vpack.c.bf16 %v1110, %v1110
        %v1114 = vpack.c.bf16 %v1108, %v1108
        %v1118 = vunpack.c.l.b16 %v1112
        %v1119 = vunpack.c.l.b16 %v1113
        %v1120 = vunpack.c.l.b16 %v1114
        %v1121 = vpack.c.b16 %v1119, %v1118
        %v1122 = vpack.c.b16 %v1120, %v1120
        %v1123 = vrot.slane %v1121, 6
        %v1124 = vrot.slane %v1122, 6
        %1125 = vrot.lane.b32.xlu0 %v1123, 110
        %v1126 = vpop.permute.xlu0 %1125
        %1127 = vrot.lane.b32.xlu0 %v1124, 110
        %v1128 = vpop.permute.xlu0 %1127
        %v1129 = vrot.slane %v1126, 4
        %v1130 = vrot.slane %v1128, 4
        %v1131 = vsel %vm626, %v1129, %v1130
        %v1132 = vsel %vm770, %v1126, %v1131
        %1134 = vst [vmem:[#allocation3 + $0x10] sm:$0xcc] %v1132
        %v1135 = vld [vmem:[#allocation2] sm:$0xff]
        %v1136 = vld [vmem:[#allocation2 + $0x8] sm:$0xf]
        %v1137 = vmul.f32 %v1135, %v780
        %v1138 = vmul.f32 %v1136, %v778
        %v1140 = vcombine.high %v1137, %v1137
        %v1142 = vpack.c.bf16 %v1137, %v1137
        %v1143 = vpack.c.bf16 %v1140, %v1140
        %v1144 = vpack.c.bf16 %v1138, %v1138
        %v1148 = vunpack.c.l.b16 %v1142
        %v1149 = vunpack.c.l.b16 %v1143
        %v1150 = vunpack.c.l.b16 %v1144
        %v1151 = vpack.c.b16 %v1149, %v1148
        %v1152 = vpack.c.b16 %v1150, %v1150
        %1153 = vrot.lane.b32.xlu0 %v1151, 96
        %v1154 = vpop.permute.xlu0 %1153
        %1155 = vrot.lane.b32.xlu0 %v1152, 96
        %v1156 = vpop.permute.xlu0 %1155
        %v1157 = vrot.slane %v1154, 4
        %v1158 = vrot.slane %v1156, 4
        %v1159 = vsel %vm626, %v1157, %v1158
        %v1160 = vsel %vm806, %v1154, %v1159
        %1162 = vst [vmem:[#allocation3 + $0x18] sm:$0x33] %v1160
        %v1163 = vld [vmem:[#allocation2] sm:$0xff]
        %v1164 = vld [vmem:[#allocation2 + $0x8] sm:$0xf]
        %v1166 = vcombine.high %v1163, %v1163
        %v1168 = vpack.c.bf16 %v1163, %v1163
        %v1169 = vpack.c.bf16 %v1166, %v1166
        %v1170 = vpack.c.bf16 %v1164, %v1164
        %v1174 = vunpack.c.l.b16 %v1168
        %v1175 = vunpack.c.l.b16 %v1169
        %v1176 = vunpack.c.l.b16 %v1170
        %v1177 = vpack.c.b16 %v1175, %v1174
        %v1178 = vpack.c.b16 %v1176, %v1176
        %v1179 = vrot.slane %v1177, 6
        %v1180 = vrot.slane %v1178, 6
        %1181 = vrot.lane.b32.xlu0 %v1179, 95
        %v1182 = vpop.permute.xlu0 %1181
        %1183 = vrot.lane.b32.xlu0 %v1180, 95
        %v1184 = vpop.permute.xlu0 %1183
        %v1185 = vrot.slane %v1182, 4
        %v1186 = vrot.slane %v1184, 4
        %v1187 = vsel %vm626, %v1185, %v1186
        %v1188 = vsel %vm835, %v1182, %v1187
        %1190 = vst [vmem:[#allocation3 + $0x18] sm:$0xcc] %v1188
        %v1191 = vld [vmem:[#allocation2] sm:$0xff]
        %v1192 = vld [vmem:[#allocation2 + $0x8] sm:$0xf]
        %v1193 = vmul.f32 %v1191, %v845
        %v1194 = vmul.f32 %v1192, %v843
        %v1196 = vcombine.high %v1193, %v1193
        %v1198 = vpack.c.bf16 %v1193, %v1193
        %v1199 = vpack.c.bf16 %v1196, %v1196
        %v1200 = vpack.c.bf16 %v1194, %v1194
        %v1204 = vunpack.c.l.b16 %v1198
        %v1205 = vunpack.c.l.b16 %v1199
        %v1206 = vunpack.c.l.b16 %v1200
        %v1207 = vpack.c.b16 %v1205, %v1204
        %v1208 = vpack.c.b16 %v1206, %v1206
        %1209 = vrot.lane.b32.xlu0 %v1207, 94
        %v1210 = vpop.permute.xlu0 %1209
        %1211 = vrot.lane.b32.xlu0 %v1208, 94
        %v1212 = vpop.permute.xlu0 %1211
        %v1213 = vrot.slane %v1210, 4
        %v1214 = vrot.slane %v1212, 4
        %v1215 = vsel %vm626, %v1213, %v1214
        %v1216 = vsel %vm871, %v1210, %v1215
        %1218 = vst [vmem:[#allocation3 + $0x20] sm:$0x33] %v1216
        %v1219 = vld [vmem:[%s5] sm:$0x3]
        %v1220 = vld [vmem:[#allocation3] sm:$0xff]
        %v1221 = vld [vmem:[#allocation3 + $0x8] sm:$0xff]
        %v1222 = vld [vmem:[#allocation3 + $0x10] sm:$0xff]
        %v1223 = vld [vmem:[#allocation3 + $0x18] sm:$0xff]
        %v1224 = vld [vmem:[#allocation3 + $0x20] sm:$0x33]
        %v1225 = vld [vmem:[%s6] sm:$0xf]
        %1227 = vset.pattern.permute.xlu0 0
        %1228 = vperm.xlu0 %1227, %v1225
        %v1229 = vpop.permute.xlu0 %1228
        %v1236 = vunpack.c.l.b16 %v1220
        %v1237 = vunpack.c.h.b16 %v1220
        %v1238 = vunpack.c.l.b16 %v1221
        %v1239 = vunpack.c.h.b16 %v1221
        %v1240 = vunpack.c.l.b16 %v1222
        %v1241 = vunpack.c.h.b16 %v1222
        %v1242 = vunpack.c.l.b16 %v1223
        %v1243 = vunpack.c.h.b16 %v1223
        %v1244 = vunpack.c.l.b16 %v1224
        %v1245 = vunpack.c.h.b16 %v1224
        %v1246 = vpack.c.b16 %v1238, %v1236
        %v1247 = vpack.c.b16 %v1239, %v1237
        %v1248 = vpack.c.b16 %v1242, %v1240
        %v1249 = vpack.c.b16 %v1243, %v1241
        %v1250 = vpack.c.b16 %v1244, %v1244
        %v1251 = vpack.c.b16 %v1245, %v1245
        %v1257 = vsel %vm912, %v1219, 0
        %v1260 = vsel %vm916, %v1250, 0
        %v1263 = vsel %vm916, %v1251, 0
        %1265 = vmatprep.subr.bf16.mxu0 0
        %1266 = vmatpush1.bf16.msra.mxu0 0
        %1267 = vmatprep.subr.bf16.mxu0 0
        %1268 = vmatpush1.bf16.msra.mxu0 0
        %1269 = vmatprep.subr.bf16.mxu0 0
        %1270 = vmatpush1.bf16.msra.mxu0 0
        %1271 = vmatprep.subr.bf16.mxu0 0
        %1272 = vmatpush1.bf16.msra.mxu0 0
        %1273 = vmatprep.subr.bf16.mxu0 0
        %1274 = vmatpush1.bf16.msra.mxu0 0
        %1275 = vmatprep.subr.bf16.mxu0 %v1263
        %1276 = vmatpush1.bf16.msra.mxu0 %v1260
        %1277 = vmatprep.subr.bf16.mxu0 %v1249
        %1278 = vmatpush1.bf16.msra.mxu0 %v1248
        %1279 = vmatprep.subr.bf16.mxu0 %v1247
        %1280 = vmatpush1.bf16.msra.mxu0 %v1246
        %1281 = vmatprep.subr.bf16.mxu0 0
        %1282 = vmatpush2.bf16.msra.mxu0 0
        %1283 = vmatprep.subr.bf16.mxu0 0
        %1284 = vmatpush2.bf16.msra.mxu0 0
        %1285 = vmatprep.subr.bf16.mxu0 0
        %1286 = vmatpush2.bf16.msra.mxu0 0
        %1287 = vmatprep.subr.bf16.mxu0 0
        %1288 = vmatpush2.bf16.msra.mxu0 0
        %1289 = vmatprep.subr.bf16.mxu0 0
        %1290 = vmatpush2.bf16.msra.mxu0 0
        %1291 = vmatprep.subr.bf16.mxu0 0
        %1292 = vmatpush2.bf16.msra.mxu0 0
        %1293 = vmatprep.subr.bf16.mxu0 0
        %1294 = vmatpush2.bf16.msra.mxu0 0
        %1295 = vmatprep.subr.bf16.mxu0 0
        %1296 = vmatpush2.bf16.msra.mxu0 0
        %1297 = vmatprep.mubr.bf16.mxu0 0
        %1298 = vmatmul.mubr.bf16.gmra.mxu0 %v1257
        %v1299 = vpop.f32.mrf.mxu0
        %v1300 = vadd.f32 %v1229, %v1299
        %v1301 = vpop.f32.mrf.mxu0
        %v1302 = vadd.f32 %v1229, %v1301
        %v1303 = vpop.f32.mrf.mxu0
        %v1304 = vpop.f32.mrf.mxu0
        %1305 = vdwg.mxu0
        %v1306 = vmax.f32 %v1300, 0.0
        %v1307 = vmax.f32 %v1302, 0.0
        %v1308 = vmin.f32 %v1306, 6.0
        %v1309 = vmin.f32 %v1307, 6.0
        %v1310 = vld [vmem:[#allocation4] sm:$0x1]
        %v1311 = vmul.f32 %v966, %v1308
        %v1312 = vmul.f32 %v967, %v1309
        %v1314 = vlaneseq
        %v1315 = vshrl.u32 %v1314, 7
        %v1316 = vsub.s32 0, %v1315
        %v1317 = vrot.slane %v1310, %v1316
        %1318 = vset.pattern.permute.xlu0 0
        %1319 = vperm.xlu0 %1318, %v1317
        %v1320 = vpop.permute.xlu0 %1319
        %v1322 = vmul.f32 %v1320, %v1311
        %v1323 = vmul.f32 %v1320, %v1312
        %v1324 = vld [vmem:[#allocation5] sm:$0x1]
        %v1326 = vlaneseq
        %v1327 = vshrl.u32 %v1326, 7
        %v1328 = vsub.s32 0, %v1327
        %v1329 = vrot.slane %v1324, %v1328
        %1330 = vset.pattern.permute.xlu0 0
        %1331 = vperm.xlu0 %1330, %v1329
        %v1332 = vpop.permute.xlu0 %1331
        %v1334 = vmul.f32 %v1332, %v565
        %v1335 = vmul.f32 %v1332, %v567
        %v1336 = vadd.f32 %v1322, %v1334
        %v1337 = vadd.f32 %v1323, %v1335
        %v1340 = vcombine.low %v1336, %v1337
        %1341 = vrot.lane.b32.xlu0 %v1340, 17
        %v1342 = vpop.permute.xlu0 %1341
        %v1343 = vrot.slane %v1342, 4
        %v1344 = vsel %vm574, %v1343, %v1342
        %1347 = vst.msk [vmem:[#allocation2] sm:$0xff] %vm580, %v1344
        %1348 = vst.msk [vmem:[#allocation2 + $0x8] sm:$0xf] %vm582, %v1343
        %v1349 = vld [vmem:[#allocation2] sm:$0xff]
        %v1350 = vmul.f32 %v1349, %v587
        %v1352 = vcombine.high %v1350, %v1350
        %v1354 = vpack.c.bf16 %v1350, %v1350
        %v1355 = vpack.c.bf16 %v1352, %v1352
        %v1358 = vunpack.c.l.b16 %v1354
        %v1359 = vunpack.c.l.b16 %v1355
        %v1360 = vpack.c.b16 %v1359, %v1358
        %1362 = vst [vmem:[#allocation3] sm:$0x33] %v1360
        %v1363 = vld [vmem:[#allocation2] sm:$0xff]
        %v1364 = vld [vmem:[#allocation2 + $0x8] sm:$0xf]
        %v1366 = vcombine.high %v1363, %v1363
        %v1368 = vpack.c.bf16 %v1363, %v1363
        %v1369 = vpack.c.bf16 %v1366, %v1366
        %v1370 = vpack.c.bf16 %v1364, %v1364
        %v1374 = vunpack.c.l.b16 %v1368
        %v1375 = vunpack.c.l.b16 %v1369
        %v1376 = vunpack.c.l.b16 %v1370
        %v1377 = vpack.c.b16 %v1375, %v1374
        %v1378 = vpack.c.b16 %v1376, %v1376
        %v1379 = vrot.slane %v1377, 6
        %v1380 = vrot.slane %v1378, 6
        %1381 = vrot.lane.b32.xlu0 %v1379, 127
        %v1382 = vpop.permute.xlu0 %1381
        %1383 = vrot.lane.b32.xlu0 %v1380, 127
        %v1384 = vpop.permute.xlu0 %1383
        %v1385 = vrot.slane %v1382, 4
        %v1386 = vrot.slane %v1384, 4
        %v1387 = vsel %vm626, %v1385, %v1386
        %v1388 = vsel %vm628, %v1382, %v1387
        %1390 = vst [vmem:[#allocation3] sm:$0xcc] %v1388
        %v1391 = vld [vmem:[#allocation2] sm:$0xff]
        %v1392 = vld [vmem:[#allocation2 + $0x8] sm:$0xf]
        %v1393 = vmul.f32 %v1391, %v641
        %v1394 = vmul.f32 %v1392, %v639
        %v1396 = vcombine.high %v1393, %v1393
        %v1398 = vpack.c.bf16 %v1393, %v1393
        %v1399 = vpack.c.bf16 %v1396, %v1396
        %v1400 = vpack.c.bf16 %v1394, %v1394
        %v1404 = vunpack.c.l.b16 %v1398
        %v1405 = vunpack.c.l.b16 %v1399
        %v1406 = vunpack.c.l.b16 %v1400
        %v1407 = vpack.c.b16 %v1405, %v1404
        %v1408 = vpack.c.b16 %v1406, %v1406
        %1409 = vrot.lane.b32.xlu0 %v1407, 126
        %v1410 = vpop.permute.xlu0 %1409
        %1411 = vrot.lane.b32.xlu0 %v1408, 126
        %v1412 = vpop.permute.xlu0 %1411
        %v1413 = vrot.slane %v1410, 4
        %v1414 = vrot.slane %v1412, 4
        %v1415 = vsel %vm626, %v1413, %v1414
        %v1416 = vsel %vm667, %v1410, %v1415
        %1418 = vst [vmem:[#allocation3 + $0x8] sm:$0x33] %v1416
        %v1419 = vld [vmem:[#allocation2] sm:$0xff]
        %v1420 = vld [vmem:[#allocation2 + $0x8] sm:$0xf]
        %v1421 = vmul.f32 %v1419, %v677
        %v1422 = vmul.f32 %v1420, %v675
        %v1424 = vcombine.high %v1421, %v1421
        %v1426 = vpack.c.bf16 %v1421, %v1421
        %v1427 = vpack.c.bf16 %v1424, %v1424
        %v1428 = vpack.c.bf16 %v1422, %v1422
        %v1432 = vunpack.c.l.b16 %v1426
        %v1433 = vunpack.c.l.b16 %v1427
        %v1434 = vunpack.c.l.b16 %v1428
        %v1435 = vpack.c.b16 %v1433, %v1432
        %v1436 = vpack.c.b16 %v1434, %v1434
        %v1437 = vrot.slane %v1435, 6
        %v1438 = vrot.slane %v1436, 6
        %1439 = vrot.lane.b32.xlu0 %v1437, 112
        %v1440 = vpop.permute.xlu0 %1439
        %1441 = vrot.lane.b32.xlu0 %v1438, 112
        %v1442 = vpop.permute.xlu0 %1441
        %v1443 = vrot.slane %v1440, 4
        %v1444 = vrot.slane %v1442, 4
        %v1445 = vsel %vm626, %v1443, %v1444
        %v1446 = vsel %vm705, %v1440, %v1445
        %1448 = vst [vmem:[#allocation3 + $0x8] sm:$0xcc] %v1446
        %v1449 = vld [vmem:[#allocation2] sm:$0xff]
        %v1450 = vld [vmem:[#allocation2 + $0x8] sm:$0xf]
        %v1452 = vcombine.high %v1449, %v1449
        %v1454 = vpack.c.bf16 %v1449, %v1449
        %v1455 = vpack.c.bf16 %v1452, %v1452
        %v1456 = vpack.c.bf16 %v1450, %v1450
        %v1460 = vunpack.c.l.b16 %v1454
        %v1461 = vunpack.c.l.b16 %v1455
        %v1462 = vunpack.c.l.b16 %v1456
        %v1463 = vpack.c.b16 %v1461, %v1460
        %v1464 = vpack.c.b16 %v1462, %v1462
        %1465 = vrot.lane.b32.xlu0 %v1463, 111
        %v1466 = vpop.permute.xlu0 %1465
        %1467 = vrot.lane.b32.xlu0 %v1464, 111
        %v1468 = vpop.permute.xlu0 %1467
        %v1469 = vrot.slane %v1466, 4
        %v1470 = vrot.slane %v1468, 4
        %v1471 = vsel %vm626, %v1469, %v1470
        %v1472 = vsel %vm732, %v1466, %v1471
        %1474 = vst [vmem:[#allocation3 + $0x10] sm:$0x33] %v1472
        %v1475 = vld [vmem:[#allocation2] sm:$0xff]
        %v1476 = vld [vmem:[#allocation2 + $0x8] sm:$0xf]
        %v1477 = vmul.f32 %v1475, %v742
        %v1478 = vmul.f32 %v1476, %v740
        %v1480 = vcombine.high %v1477, %v1477
        %v1482 = vpack.c.bf16 %v1477, %v1477
        %v1483 = vpack.c.bf16 %v1480, %v1480
        %v1484 = vpack.c.bf16 %v1478, %v1478
        %v1488 = vunpack.c.l.b16 %v1482
        %v1489 = vunpack.c.l.b16 %v1483
        %v1490 = vunpack.c.l.b16 %v1484
        %v1491 = vpack.c.b16 %v1489, %v1488
        %v1492 = vpack.c.b16 %v1490, %v1490
        %v1493 = vrot.slane %v1491, 6
        %v1494 = vrot.slane %v1492, 6
        %1495 = vrot.lane.b32.xlu0 %v1493, 110
        %v1496 = vpop.permute.xlu0 %1495
        %1497 = vrot.lane.b32.xlu0 %v1494, 110
        %v1498 = vpop.permute.xlu0 %1497
        %v1499 = vrot.slane %v1496, 4
        %v1500 = vrot.slane %v1498, 4
        %v1501 = vsel %vm626, %v1499, %v1500
        %v1502 = vsel %vm770, %v1496, %v1501
        %1504 = vst [vmem:[#allocation3 + $0x10] sm:$0xcc] %v1502
        %v1505 = vld [vmem:[#allocation2] sm:$0xff]
        %v1506 = vld [vmem:[#allocation2 + $0x8] sm:$0xf]
        %v1507 = vmul.f32 %v1505, %v780
        %v1508 = vmul.f32 %v1506, %v778
        %v1510 = vcombine.high %v1507, %v1507
        %v1512 = vpack.c.bf16 %v1507, %v1507
        %v1513 = vpack.c.bf16 %v1510, %v1510
        %v1514 = vpack.c.bf16 %v1508, %v1508
        %v1518 = vunpack.c.l.b16 %v1512
        %v1519 = vunpack.c.l.b16 %v1513
        %v1520 = vunpack.c.l.b16 %v1514
        %v1521 = vpack.c.b16 %v1519, %v1518
        %v1522 = vpack.c.b16 %v1520, %v1520
        %1523 = vrot.lane.b32.xlu0 %v1521, 96
        %v1524 = vpop.permute.xlu0 %1523
        %1525 = vrot.lane.b32.xlu0 %v1522, 96
        %v1526 = vpop.permute.xlu0 %1525
        %v1527 = vrot.slane %v1524, 4
        %v1528 = vrot.slane %v1526, 4
        %v1529 = vsel %vm626, %v1527, %v1528
        %v1530 = vsel %vm806, %v1524, %v1529
        %1532 = vst [vmem:[#allocation3 + $0x18] sm:$0x33] %v1530
        %v1533 = vld [vmem:[#allocation2] sm:$0xff]
        %v1534 = vld [vmem:[#allocation2 + $0x8] sm:$0xf]
        %v1536 = vcombine.high %v1533, %v1533
        %v1538 = vpack.c.bf16 %v1533, %v1533
        %v1539 = vpack.c.bf16 %v1536, %v1536
        %v1540 = vpack.c.bf16 %v1534, %v1534
        %v1544 = vunpack.c.l.b16 %v1538
        %v1545 = vunpack.c.l.b16 %v1539
        %v1546 = vunpack.c.l.b16 %v1540
        %v1547 = vpack.c.b16 %v1545, %v1544
        %v1548 = vpack.c.b16 %v1546, %v1546
        %v1549 = vrot.slane %v1547, 6
        %v1550 = vrot.slane %v1548, 6
        %1551 = vrot.lane.b32.xlu0 %v1549, 95
        %v1552 = vpop.permute.xlu0 %1551
        %1553 = vrot.lane.b32.xlu0 %v1550, 95
        %v1554 = vpop.permute.xlu0 %1553
        %v1555 = vrot.slane %v1552, 4
        %v1556 = vrot.slane %v1554, 4
        %v1557 = vsel %vm626, %v1555, %v1556
        %v1558 = vsel %vm835, %v1552, %v1557
        %1560 = vst [vmem:[#allocation3 + $0x18] sm:$0xcc] %v1558
        %v1561 = vld [vmem:[#allocation2] sm:$0xff]
        %v1562 = vld [vmem:[#allocation2 + $0x8] sm:$0xf]
        %v1563 = vmul.f32 %v1561, %v845
        %v1564 = vmul.f32 %v1562, %v843
        %v1566 = vcombine.high %v1563, %v1563
        %v1568 = vpack.c.bf16 %v1563, %v1563
        %v1569 = vpack.c.bf16 %v1566, %v1566
        %v1570 = vpack.c.bf16 %v1564, %v1564
        %v1574 = vunpack.c.l.b16 %v1568
        %v1575 = vunpack.c.l.b16 %v1569
        %v1576 = vunpack.c.l.b16 %v1570
        %v1577 = vpack.c.b16 %v1575, %v1574
        %v1578 = vpack.c.b16 %v1576, %v1576
        %1579 = vrot.lane.b32.xlu0 %v1577, 94
        %v1580 = vpop.permute.xlu0 %1579
        %1581 = vrot.lane.b32.xlu0 %v1578, 94
        %v1582 = vpop.permute.xlu0 %1581
        %v1583 = vrot.slane %v1580, 4
        %v1584 = vrot.slane %v1582, 4
        %v1585 = vsel %vm626, %v1583, %v1584
        %v1586 = vsel %vm871, %v1580, %v1585
        %1588 = vst [vmem:[#allocation3 + $0x20] sm:$0x33] %v1586
        %v1589 = vld [vmem:[%s7] sm:$0xf]
        %v1590 = vld [vmem:[#allocation3] sm:$0xff]
        %v1591 = vld [vmem:[#allocation3 + $0x8] sm:$0xff]
        %v1592 = vld [vmem:[#allocation3 + $0x10] sm:$0xff]
        %v1593 = vld [vmem:[#allocation3 + $0x18] sm:$0xff]
        %v1594 = vld [vmem:[#allocation3 + $0x20] sm:$0x33]
        %v1595 = vld [vmem:[%s8] sm:$0xff]
        %1597 = vset.pattern.permute.xlu0 0
        %1598 = vperm.xlu0 %1597, %v1595
        %v1599 = vpop.permute.xlu0 %1598
        %v1606 = vunpack.c.l.b16 %v1590
        %v1607 = vunpack.c.h.b16 %v1590
        %v1608 = vunpack.c.l.b16 %v1591
        %v1609 = vunpack.c.h.b16 %v1591
        %v1610 = vunpack.c.l.b16 %v1592
        %v1611 = vunpack.c.h.b16 %v1592
        %v1612 = vunpack.c.l.b16 %v1593
        %v1613 = vunpack.c.h.b16 %v1593
        %v1614 = vunpack.c.l.b16 %v1594
        %v1615 = vunpack.c.h.b16 %v1594
        %v1616 = vpack.c.b16 %v1608, %v1606
        %v1617 = vpack.c.b16 %v1609, %v1607
        %v1618 = vpack.c.b16 %v1612, %v1610
        %v1619 = vpack.c.b16 %v1613, %v1611
        %v1620 = vpack.c.b16 %v1614, %v1614
        %v1621 = vpack.c.b16 %v1615, %v1615
        %v1627 = vsel %vm912, %v1589, 0
        %v1630 = vsel %vm916, %v1620, 0
        %v1633 = vsel %vm916, %v1621, 0
        %1635 = vmatprep.subr.bf16.mxu0 0
        %1636 = vmatpush1.bf16.msra.mxu0 0
        %1637 = vmatprep.subr.bf16.mxu0 0
        %1638 = vmatpush1.bf16.msra.mxu0 0
        %1639 = vmatprep.subr.bf16.mxu0 0
        %1640 = vmatpush1.bf16.msra.mxu0 0
        %1641 = vmatprep.subr.bf16.mxu0 0
        %1642 = vmatpush1.bf16.msra.mxu0 0
        %1643 = vmatprep.subr.bf16.mxu0 0
        %1644 = vmatpush1.bf16.msra.mxu0 0
        %1645 = vmatprep.subr.bf16.mxu0 %v1633
        %1646 = vmatpush1.bf16.msra.mxu0 %v1630
        %1647 = vmatprep.subr.bf16.mxu0 %v1619
        %1648 = vmatpush1.bf16.msra.mxu0 %v1618
        %1649 = vmatprep.subr.bf16.mxu0 %v1617
        %1650 = vmatpush1.bf16.msra.mxu0 %v1616
        %1651 = vmatprep.subr.bf16.mxu0 0
        %1652 = vmatpush2.bf16.msra.mxu0 0
        %1653 = vmatprep.subr.bf16.mxu0 0
        %1654 = vmatpush2.bf16.msra.mxu0 0
        %1655 = vmatprep.subr.bf16.mxu0 0
        %1656 = vmatpush2.bf16.msra.mxu0 0
        %1657 = vmatprep.subr.bf16.mxu0 0
        %1658 = vmatpush2.bf16.msra.mxu0 0
        %1659 = vmatprep.subr.bf16.mxu0 0
        %1660 = vmatpush2.bf16.msra.mxu0 0
        %1661 = vmatprep.subr.bf16.mxu0 0
        %1662 = vmatpush2.bf16.msra.mxu0 0
        %1663 = vmatprep.subr.bf16.mxu0 0
        %1664 = vmatpush2.bf16.msra.mxu0 0
        %1665 = vmatprep.subr.bf16.mxu0 0
        %1666 = vmatpush2.bf16.msra.mxu0 0
        %1667 = vmatprep.mubr.bf16.mxu0 0
        %1668 = vmatmul.mubr.bf16.gmra.mxu0 %v1627
        %v1669 = vpop.f32.mrf.mxu0
        %v1670 = vadd.f32 %v1599, %v1669
        %v1671 = vpop.f32.mrf.mxu0
        %v1672 = vadd.f32 %v1599, %v1671
        %v1673 = vpop.f32.mrf.mxu0
        %v1674 = vpop.f32.mrf.mxu0
        %1675 = vdwg.mxu0
        %v1676 = vmax.f32 %v1670, 0.0
        %v1677 = vmax.f32 %v1672, 0.0
        %v1678 = vmin.f32 %v1676, 6.0
        %v1679 = vmin.f32 %v1677, 6.0
        %1680 = vst [vmem:[%s424] sm:$0xff] %v1678
        %1681 = vst [vmem:[%s424 + $0x8] sm:$0xff] %v1679
        %s1682 = sand.u32 %s280, 1
        %s1683 = scalar_lea.sflag [#allocation8], %s1682
        %s1684 = sand.u32 %s280, 1
        %s1685 = smul.addr %s1684, 16
        %s1686 = scalar_lea.vmem [#allocation11], %s1685
        // Predicated region
        $region73: #{tpu_custom_call.1} parent=63 // pred_check
          %p1687 = pneg %p290
        $region74: #{tpu_custom_call.1} parent=63 // pred_check_branch
          %1689 = sbr.rel (%p1687) target = $region76
        $region75: #{tpu_custom_call.1} parent=63 // pred_region
          %s1691 = ssub.s32 256, 256
          %1692 = vsyncadd %s1683, %s1691
          %s1693 = smul.addr %s31, 2
          %s1694 = smul.addr %s1693, 128
          %s1695 = scalar_lea.hbm %s11, %s1694
          %s1697 = sshll.u32 %s1686, 4
          %s1698 = int_to_ptr.vmem [resolvable:$true] %s1697
          %1700 = dma.vmem_to_hbm [thread:$0]  %s1698, 256, %s1695, %s1683
        $region76: #{tpu_custom_call.1} parent=63 // pred_fallthru
          _
      $region64: #{tpu_custom_call.1} parent=5 // pred_fallthru
        _
      %p1701 = scmp.le.s32.totalorder 2, %s26
      // Predicated region
      $region77: #{tpu_custom_call.1} parent=5 // pred_check
        %p1702 = pneg %p1701
      $region78: #{tpu_custom_call.1} parent=5 // pred_check_branch
        %1704 = sbr.rel (%p1702) target = $region80
      $region79: #{tpu_custom_call.1} parent=5 // pred_region
        %s1705 = ssub.s32 %s26, 2
        // Predicated region
        $region81: #{tpu_custom_call.1} parent=79 // pred_check
          %p1706 = pneg %p296
        $region82: #{tpu_custom_call.1} parent=79 // pred_check_branch
          %1708 = sbr.rel (%p1706) target = $region84
        $region83: #{tpu_custom_call.1} parent=79 // pred_region
          %s1709 = sand.u32 %s281, 1
          %s1710 = scalar_lea.sflag [#allocation8], %s1709
          %s1711 = sand.u32 %s281, 1
          %s1712 = smul.addr %s1711, 16
          %s1713 = scalar_lea.vmem [#allocation11], %s1712
          %1714 = dma.done %s1710, 256
        $region84: #{tpu_custom_call.1} parent=79 // pred_fallthru
          _
      $region80: #{tpu_custom_call.1} parent=5 // pred_fallthru
        _
    $region6: #{tpu_custom_call.1} parent=1 // loop_footer
      %s30 = sadd.s32 1, %s26
    $region7: #{tpu_custom_call.1} parent=1 // loop_footer_branch
      %25 = sbr.rel target = $region3
    $region8: #{tpu_custom_call.1} parent=1 // loop_exit
      _
    %1715 = vsyncpa [#allocation7], 1
    %s1716 = scalar_lea.sflag [#allocation7], 1
    %1717 = vsyncpa %s1716, 1
    %1718 = vsyncpa [#allocation10], 1
    %1719 = vsyncpa [#allocation8], 1
    %s1720 = scalar_lea.sflag [#allocation8], 1
    %1721 = vsyncpa %s1720, 1

</llo_original>
